<compile_context>
chip_gen: v7x
topology: tpu7x:2x2x1
jax: 0.10.0
libtpu: 0.0.40
codegen_flags: <defaults>
</compile_context>

<pallas_src>
import jax
import jax.numpy as jnp
from jax.experimental import pallas as pl
from jax.experimental.pallas import tpu as pltpu

# Module hyperparameters (from the PyTorch script)
INPUT_DIM = 2
HIDDEN_DIM = 12
LAYER_DIM = 3
OUTPUT_DIM = 1
DROPOUT_PROB = 0.2  # inactive at inference

_PREC = jax.lax.Precision.HIGHEST  # only used off the critical path (addend / fc)


def rnn_wavefront_kernel(x_ref, w0_ref, wbig_ref, fcw_ref, fcb_ref, out_ref):
    """Whole RNN forward in one gridless invocation (total data < 10 KB).

    x_ref   : (S*Bp, D_in+L) f32  time-major sequence, batch padded to Bp=8*k,
                                  time padded with L-1 tail steps; last L
                                  columns are per-layer 0/1 bias injectors
                                  (column l == 1 iff step s >= l).
    w0_ref  : (D_in+L, L*H)  f32  rows 0..D_in-1: layer-0 W_ih^T into block-0
                                  columns; row D_in+l: (b_ih_l + b_hh_l) into
                                  block-l columns only.
    wbig_ref: (L*H, L*H)     bf16 block matrix: block (l, l) = W_hh_l^T,
                                  block (l-1, l) = W_ih_l^T for l >= 1.
    fcw_ref : (L*H, O)       f32  rows (L-1)*H.. = fc.weight^T, other rows zero.
    fcb_ref : (1, O)         f32  fc.bias.
    out_ref : (Bp, O)        f32
    """
    Bp = out_ref.shape[0]
    S = x_ref.shape[0] // Bp          # = T + L - 1 wavefront steps
    LH = wbig_ref.shape[0]

    # One hoisted, off-critical-path matmul produces, for every wavefront step,
    # the full additive term (layer-0 input projection + gated per-layer
    # biases). The injector columns bake the warm-up masking into the addend.
    addend = jnp.dot(x_ref[...], w0_ref[...],
                     precision=_PREC, preferred_element_type=jnp.float32)  # (S*Bp, LH)

    w_big = wbig_ref[...]             # bf16, constant RHS across the loop

    # Wavefront recurrence: at step s, block l of `state` holds h_l(t = s - l).
    # Serialized MXU chain length = S = T + L - 1; each link is ONE bf16 pass.
    # Bp is a multiple of 8, so every addend slice is an aligned sublane tile.
    state = jnp.zeros((Bp, LH), jnp.float32)
    for s in range(S):                # static unroll (S = 10)
        state = jnp.tanh(
            jnp.dot(state.astype(jnp.bfloat16), w_big,
                    preferred_element_type=jnp.float32)
            + addend[s * Bp:(s + 1) * Bp, :])

    # out = h_{L-1}(T-1) @ fc_w^T + fc_b; the zero rows of fcw select the
    # top-layer block without any in-kernel lane/sublane slicing.
    out_ref[...] = (jnp.dot(state, fcw_ref[...], precision=_PREC,
                            preferred_element_type=jnp.float32)
                    + fcb_ref[...])


def rnn_model_forward(x, packed):
    """x: (B, T, D_in) batch_first, as in the PyTorch module. Returns (B, O).

    Meant to be wrapped in a single jax.jit so the x augmentation fuses with
    the pallas_call dispatch.
    """
    B, T, d_in = x.shape
    L, O = LAYER_DIM, OUTPUT_DIM
    S = T + L - 1
    Bp = ((B + 7) // 8) * 8           # sublane-aligned batch

    # XLA glue (same jit as the kernel): time-major, pad batch to Bp and time by
    # L-1 wavefront tail steps, append per-layer 0/1 bias-injector columns.
    x_tm = jnp.transpose(x, (1, 0, 2)).astype(jnp.float32)            # (T, B, D_in)
    x_tm = jnp.pad(x_tm, ((0, L - 1), (0, Bp - B), (0, 0)))           # (S, Bp, D_in)
    inject = (jnp.arange(S)[:, None] >= jnp.arange(L)[None, :]).astype(jnp.float32)
    inject = jnp.broadcast_to(inject[:, None, :], (S, Bp, L))         # (S, Bp, L)
    x_aug = jnp.concatenate([x_tm, inject], axis=-1).reshape(S * Bp, d_in + L)

    vmem = pl.BlockSpec(memory_space=pltpu.MemorySpace.VMEM)
    # Gridless single program: the whole problem is a few vregs; any grid would
    # be pure per-step overhead at this size.
    # TODO(synk): for production batch sizes, add a batch-tile grid with
    # dimension_semantics=("parallel",) so v7x's two TensorCores split the batch
    # (size tiles against 64 MiB VMEM there).
    out_p = pl.pallas_call(
        rnn_wavefront_kernel,
        out_shape=jax.ShapeDtypeStruct((Bp, O), jnp.float32),
        in_specs=[vmem] * 5,
        out_specs=vmem,
    )(x_aug, packed["w0_aug"], packed["w_big"], packed["fc_w"], packed["fc_b"])
    return out_p[:B]


def init_raw_params(key):
    """PyTorch-layout parameters: uniform(-k, k), k = 1/sqrt(H)."""
    keys = jax.random.split(key, 16)
    k = 1.0 / jnp.sqrt(jnp.float32(HIDDEN_DIM))

    def u(rng, shape):
        return jax.random.uniform(rng, shape, jnp.float32, -k, k)

    return {
        "w_ih0": u(keys[0], (HIDDEN_DIM, INPUT_DIM)),                        # (H, D_in)
        "w_ih_rest": jnp.stack([u(keys[1 + i], (HIDDEN_DIM, HIDDEN_DIM))
                                for i in range(LAYER_DIM - 1)]),             # (L-1, H, H)
        "w_hh": jnp.stack([u(keys[4 + i], (HIDDEN_DIM, HIDDEN_DIM))
                           for i in range(LAYER_DIM)]),                      # (L, H, H)
        "b_ih": jnp.stack([u(keys[8 + i], (HIDDEN_DIM,))
                           for i in range(LAYER_DIM)]),                      # (L, H)
        "b_hh": jnp.stack([u(keys[11 + i], (HIDDEN_DIM,))
                           for i in range(LAYER_DIM)]),                      # (L, H)
        "fc_w": u(keys[14], (OUTPUT_DIM, HIDDEN_DIM)),                       # (O, H)
        "fc_b": u(keys[15], (OUTPUT_DIM,)),                                  # (O,)
    }


def pack_params(raw):
    """Pack PyTorch-layout weights into the kernel's fused layout (host glue)."""
    L, H, O, d_in = LAYER_DIM, HIDDEN_DIM, OUTPUT_DIM, INPUT_DIM
    LH = L * H

    # (D_in+L, LH): layer-0 input weights into block-0 columns + one bias row
    # per layer (so the per-step injector columns gate each layer's bias).
    w0_aug = jnp.zeros((d_in + L, LH), jnp.float32)
    w0_aug = w0_aug.at[:d_in, :H].set(raw["w_ih0"].T)
    for l in range(L):
        w0_aug = w0_aug.at[d_in + l, l * H:(l + 1) * H].set(
            raw["b_ih"][l] + raw["b_hh"][l])

    # (LH, LH): block-diag W_hh^T, superdiag W_ih^T. Stored bf16 so the
    # serialized recurrent dots are single-pass MXU ops.
    w_big = jnp.zeros((LH, LH), jnp.float32)
    for l in range(L):
        w_big = w_big.at[l * H:(l + 1) * H, l * H:(l + 1) * H].set(raw["w_hh"][l].T)
        if l > 0:
            w_big = w_big.at[(l - 1) * H:l * H, l * H:(l + 1) * H].set(
                raw["w_ih_rest"][l - 1].T)

    # (LH, O): fc weight aligned with the top-layer block, zeros elsewhere.
    fc_w = jnp.zeros((LH, O), jnp.float32)
    fc_w = fc_w.at[(L - 1) * H:, :].set(raw["fc_w"].T)
    fc_b = raw["fc_b"].reshape(1, O).astype(jnp.float32)

    return {"w0_aug": w0_aug, "w_big": w_big.astype(jnp.bfloat16),
            "fc_w": fc_w, "fc_b": fc_b}


def reference_forward(x, raw):
    """Independent pure-JAX layer-major f32 reference mirroring the PyTorch forward."""
    B, T, _ = x.shape
    layer_in = x
    for l in range(LAYER_DIM):
        w_ih = raw["w_ih0"] if l == 0 else raw["w_ih_rest"][l - 1]
        w_hh = raw["w_hh"][l]
        bias = (raw["b_ih"][l] + raw["b_hh"][l])[None, :]
        h = jnp.zeros((B, HIDDEN_DIM), jnp.float32)
        outs = []
        for t in range(T):
            h = jnp.tanh(
                jnp.dot(layer_in[:, t, :], w_ih.T, precision=_PREC)
                + jnp.dot(h, w_hh.T, precision=_PREC)
                + bias)
            outs.append(h)
        layer_in = jnp.stack(outs, axis=1)
    return (jnp.dot(layer_in[:, -1, :], raw["fc_w"].T, precision=_PREC)
            + raw["fc_b"][None, :])


if __name__ == "__main__":
    key = jax.random.PRNGKey(0)
    k_params, k_x = jax.random.split(key)
    raw = init_raw_params(k_params)
    packed = pack_params(raw)

    B, T = 2, 8
    x = jax.random.normal(k_x, (B, T, INPUT_DIM), jnp.float32)

    forward = jax.jit(rnn_model_forward)
    out = jax.block_until_ready(forward(x, packed))
    ref = jax.block_until_ready(reference_forward(x, raw))

    assert out.shape == (B, OUTPUT_DIM)
    # bf16 recurrent matmuls (f32 accumulation, f32 tanh/biases) -> relaxed tol.
    assert jnp.allclose(out, ref, atol=1e-2, rtol=1e-2), (out, ref)

    print("KERNEL_OK")
</pallas_src>

<mosaic_0001>
module attributes {stable_mosaic.version = 11 : i64} {
  func.func @rnn_wavefront_kernel(%arg0: memref<80x5xf32, #tpu.memory_space<vmem>>, %arg1: memref<5x36xf32, #tpu.memory_space<vmem>>, %arg2: memref<36x36xbf16, #tpu.memory_space<vmem>>, %arg3: memref<36x1xf32, #tpu.memory_space<vmem>>, %arg4: memref<1x1xf32, #tpu.memory_space<vmem>>, %arg5: memref<8x1xf32, #tpu.memory_space<vmem>>) attributes {dimension_semantics = [], scalar_prefetch = 0 : i64, scratch_operands = 0 : i64, tpu.core_type = #tpu.core_type<tc>} {
    %c0 = arith.constant 0 : index
    %c0_0 = arith.constant 0 : index
    %0 = vector.load %arg0[%c0, %c0_0] : memref<80x5xf32, #tpu.memory_space<vmem>>, vector<80x5xf32>
    %c0_1 = arith.constant 0 : index
    %c0_2 = arith.constant 0 : index
    %1 = vector.load %arg1[%c0_1, %c0_2] : memref<5x36xf32, #tpu.memory_space<vmem>>, vector<5x36xf32>
    %cst = arith.constant dense<0.000000e+00> : vector<80x36xf32>
    %2 = tpu.matmul %0, %1, %cst {dimension_numbers = #tpu.dot_dimension_numbers<[1], [0], [0], [1], [0, 0, 1, 1], [], []>, precision = #tpu.contract_precision<fp32>} : vector<80x5xf32>, vector<5x36xf32>, vector<80x36xf32> -> vector<80x36xf32>
    %c0_3 = arith.constant 0 : index
    %c0_4 = arith.constant 0 : index
    %3 = vector.load %arg2[%c0_3, %c0_4] : memref<36x36xbf16, #tpu.memory_space<vmem>>, vector<36x36xbf16>
    %cst_5 = arith.constant 0.000000e+00 : f32
    %4 = vector.broadcast %cst_5 : f32 to vector<8x36xf32>
    %5 = arith.truncf %4 : vector<8x36xf32> to vector<8x36xbf16>
    %cst_6 = arith.constant dense<0.000000e+00> : vector<8x36xf32>
    %6 = tpu.matmul %5, %3, %cst_6 {dimension_numbers = #tpu.dot_dimension_numbers<[1], [0], [0], [1], [0, 0, 1, 1], [], []>} : vector<8x36xbf16>, vector<36x36xbf16>, vector<8x36xf32> -> vector<8x36xf32>
    %7 = vector.extract_strided_slice %2 {offsets = [0, 0], sizes = [8, 36], strides = [1, 1]} : vector<80x36xf32> to vector<8x36xf32>
    %8 = arith.addf %6, %7 : vector<8x36xf32>
    %9 = math.tanh %8 : vector<8x36xf32>
    %10 = arith.truncf %9 : vector<8x36xf32> to vector<8x36xbf16>
    %cst_7 = arith.constant dense<0.000000e+00> : vector<8x36xf32>
    %11 = tpu.matmul %10, %3, %cst_7 {dimension_numbers = #tpu.dot_dimension_numbers<[1], [0], [0], [1], [0, 0, 1, 1], [], []>} : vector<8x36xbf16>, vector<36x36xbf16>, vector<8x36xf32> -> vector<8x36xf32>
    %12 = vector.extract_strided_slice %2 {offsets = [8, 0], sizes = [8, 36], strides = [1, 1]} : vector<80x36xf32> to vector<8x36xf32>
    %13 = arith.addf %11, %12 : vector<8x36xf32>
    %14 = math.tanh %13 : vector<8x36xf32>
    %15 = arith.truncf %14 : vector<8x36xf32> to vector<8x36xbf16>
    %cst_8 = arith.constant dense<0.000000e+00> : vector<8x36xf32>
    %16 = tpu.matmul %15, %3, %cst_8 {dimension_numbers = #tpu.dot_dimension_numbers<[1], [0], [0], [1], [0, 0, 1, 1], [], []>} : vector<8x36xbf16>, vector<36x36xbf16>, vector<8x36xf32> -> vector<8x36xf32>
    %17 = vector.extract_strided_slice %2 {offsets = [16, 0], sizes = [8, 36], strides = [1, 1]} : vector<80x36xf32> to vector<8x36xf32>
    %18 = arith.addf %16, %17 : vector<8x36xf32>
    %19 = math.tanh %18 : vector<8x36xf32>
    %20 = arith.truncf %19 : vector<8x36xf32> to vector<8x36xbf16>
    %cst_9 = arith.constant dense<0.000000e+00> : vector<8x36xf32>
    %21 = tpu.matmul %20, %3, %cst_9 {dimension_numbers = #tpu.dot_dimension_numbers<[1], [0], [0], [1], [0, 0, 1, 1], [], []>} : vector<8x36xbf16>, vector<36x36xbf16>, vector<8x36xf32> -> vector<8x36xf32>
    %22 = vector.extract_strided_slice %2 {offsets = [24, 0], sizes = [8, 36], strides = [1, 1]} : vector<80x36xf32> to vector<8x36xf32>
    %23 = arith.addf %21, %22 : vector<8x36xf32>
    %24 = math.tanh %23 : vector<8x36xf32>
    %25 = arith.truncf %24 : vector<8x36xf32> to vector<8x36xbf16>
    %cst_10 = arith.constant dense<0.000000e+00> : vector<8x36xf32>
    %26 = tpu.matmul %25, %3, %cst_10 {dimension_numbers = #tpu.dot_dimension_numbers<[1], [0], [0], [1], [0, 0, 1, 1], [], []>} : vector<8x36xbf16>, vector<36x36xbf16>, vector<8x36xf32> -> vector<8x36xf32>
    %27 = vector.extract_strided_slice %2 {offsets = [32, 0], sizes = [8, 36], strides = [1, 1]} : vector<80x36xf32> to vector<8x36xf32>
    %28 = arith.addf %26, %27 : vector<8x36xf32>
    %29 = math.tanh %28 : vector<8x36xf32>
    %30 = arith.truncf %29 : vector<8x36xf32> to vector<8x36xbf16>
    %cst_11 = arith.constant dense<0.000000e+00> : vector<8x36xf32>
    %31 = tpu.matmul %30, %3, %cst_11 {dimension_numbers = #tpu.dot_dimension_numbers<[1], [0], [0], [1], [0, 0, 1, 1], [], []>} : vector<8x36xbf16>, vector<36x36xbf16>, vector<8x36xf32> -> vector<8x36xf32>
    %32 = vector.extract_strided_slice %2 {offsets = [40, 0], sizes = [8, 36], strides = [1, 1]} : vector<80x36xf32> to vector<8x36xf32>
    %33 = arith.addf %31, %32 : vector<8x36xf32>
    %34 = math.tanh %33 : vector<8x36xf32>
    %35 = arith.truncf %34 : vector<8x36xf32> to vector<8x36xbf16>
    %cst_12 = arith.constant dense<0.000000e+00> : vector<8x36xf32>
    %36 = tpu.matmul %35, %3, %cst_12 {dimension_numbers = #tpu.dot_dimension_numbers<[1], [0], [0], [1], [0, 0, 1, 1], [], []>} : vector<8x36xbf16>, vector<36x36xbf16>, vector<8x36xf32> -> vector<8x36xf32>
    %37 = vector.extract_strided_slice %2 {offsets = [48, 0], sizes = [8, 36], strides = [1, 1]} : vector<80x36xf32> to vector<8x36xf32>
    %38 = arith.addf %36, %37 : vector<8x36xf32>
    %39 = math.tanh %38 : vector<8x36xf32>
    %40 = arith.truncf %39 : vector<8x36xf32> to vector<8x36xbf16>
    %cst_13 = arith.constant dense<0.000000e+00> : vector<8x36xf32>
    %41 = tpu.matmul %40, %3, %cst_13 {dimension_numbers = #tpu.dot_dimension_numbers<[1], [0], [0], [1], [0, 0, 1, 1], [], []>} : vector<8x36xbf16>, vector<36x36xbf16>, vector<8x36xf32> -> vector<8x36xf32>
    %42 = vector.extract_strided_slice %2 {offsets = [56, 0], sizes = [8, 36], strides = [1, 1]} : vector<80x36xf32> to vector<8x36xf32>
    %43 = arith.addf %41, %42 : vector<8x36xf32>
    %44 = math.tanh %43 : vector<8x36xf32>
    %45 = arith.truncf %44 : vector<8x36xf32> to vector<8x36xbf16>
    %cst_14 = arith.constant dense<0.000000e+00> : vector<8x36xf32>
    %46 = tpu.matmul %45, %3, %cst_14 {dimension_numbers = #tpu.dot_dimension_numbers<[1], [0], [0], [1], [0, 0, 1, 1], [], []>} : vector<8x36xbf16>, vector<36x36xbf16>, vector<8x36xf32> -> vector<8x36xf32>
    %47 = vector.extract_strided_slice %2 {offsets = [64, 0], sizes = [8, 36], strides = [1, 1]} : vector<80x36xf32> to vector<8x36xf32>
    %48 = arith.addf %46, %47 : vector<8x36xf32>
    %49 = math.tanh %48 : vector<8x36xf32>
    %50 = arith.truncf %49 : vector<8x36xf32> to vector<8x36xbf16>
    %cst_15 = arith.constant dense<0.000000e+00> : vector<8x36xf32>
    %51 = tpu.matmul %50, %3, %cst_15 {dimension_numbers = #tpu.dot_dimension_numbers<[1], [0], [0], [1], [0, 0, 1, 1], [], []>} : vector<8x36xbf16>, vector<36x36xbf16>, vector<8x36xf32> -> vector<8x36xf32>
    %52 = vector.extract_strided_slice %2 {offsets = [72, 0], sizes = [8, 36], strides = [1, 1]} : vector<80x36xf32> to vector<8x36xf32>
    %53 = arith.addf %51, %52 : vector<8x36xf32>
    %54 = math.tanh %53 : vector<8x36xf32>
    %c0_16 = arith.constant 0 : index
    %c0_17 = arith.constant 0 : index
    %55 = vector.load %arg3[%c0_16, %c0_17] : memref<36x1xf32, #tpu.memory_space<vmem>>, vector<36x1xf32>
    %cst_18 = arith.constant dense<0.000000e+00> : vector<8x1xf32>
    %56 = tpu.matmul %54, %55, %cst_18 {dimension_numbers = #tpu.dot_dimension_numbers<[1], [0], [0], [1], [0, 0, 1, 1], [], []>, precision = #tpu.contract_precision<fp32>} : vector<8x36xf32>, vector<36x1xf32>, vector<8x1xf32> -> vector<8x1xf32>
    %c0_19 = arith.constant 0 : index
    %c0_20 = arith.constant 0 : index
    %57 = vector.load %arg4[%c0_19, %c0_20] : memref<1x1xf32, #tpu.memory_space<vmem>>, vector<1x1xf32>
    %58 = vector.broadcast %57 : vector<1x1xf32> to vector<8x1xf32>
    %59 = arith.addf %56, %58 : vector<8x1xf32>
    %c0_21 = arith.constant 0 : index
    %c0_22 = arith.constant 0 : index
    %60 = vector.load %arg5[%c0_21, %c0_22] : memref<8x1xf32, #tpu.memory_space<vmem>>, vector<8x1xf32>
    tpu.vector_store %arg5[%c0_21, %c0_22], %59 {strides = array<i32>} : memref<8x1xf32, #tpu.memory_space<vmem>>, vector<8x1xf32>,
    return
  }
}

</mosaic_0001>

<llo_original>
// kernel: rnn_model_forward.1
$region0: #{rnn_model_forward.1}
  #allocation0 [shape = 'u32[]', space=smem, size = 0x4, offset = 0x4, fixed_abs, tag = 'smem constant byte address 0x4 - core index']
  #allocation1 [shape = 'u32[144,128]{1,0:T(1,128)}', space=vmem, size = 0x12000, scoped, tag = 'internal scratch']
  #allocation2 [shape = 'f32[1,1]{1,0:T(1,128)S(1)}', space=vmem, size = 0x200, scoped, tag = 'scoped memory for rnn_model_forward.1']
  %s0 = inlined_call_operand.vmem [shape: f32[80,5], index: 0, kind: input, shape index: {}]
  %s1 = inlined_call_operand.vmem [shape: f32[5,36], index: 1, kind: input, shape index: {}]
  %s2 = inlined_call_operand.vmem [shape: bf16[36,36], index: 2, kind: input, shape index: {}]
  %s3 = inlined_call_operand.vmem [shape: f32[36,1], index: 3, kind: input, shape index: {}]
  %s4 = inlined_call_operand.<no memory space> [shape: f32[1,1], index: 4, kind: input, shape index: {}]
  %s5 = inlined_call_operand.vmem [shape: f32[8,1], index: 5, kind: output, shape index: {}]
  %s6 = sld [smem:[#allocation0]]
  $region30: #{rnn_model_forward.1} parent=0
    _
  %s8 = ssub.s32 1, %s6
  %s9 = scalar_select 0, %s8, %s6
  %v10 = vstv %s4
  %11 = vst [vmem:[#allocation2] sm:$0x1] %v10
  // Predicated region
  $region2: #{rnn_model_forward.1} parent=0 // pred_check
    _
  $region3: #{rnn_model_forward.1} parent=0 // pred_check_branch
    %13 = sbr.rel (0) target = $region5
  $region4: #{rnn_model_forward.1} parent=0 // pred_region
    _
  $region5: #{rnn_model_forward.1} parent=0 // pred_fallthru
    _
  // Predicated region
  $region6: #{rnn_model_forward.1} parent=0 // pred_check
    _
  $region7: #{rnn_model_forward.1} parent=0 // pred_check_branch
    %15 = sbr.rel (0) target = $region9
  $region8: #{rnn_model_forward.1} parent=0 // pred_region
    _
  $region9: #{rnn_model_forward.1} parent=0 // pred_fallthru
    _
  // Predicated region
  $region10: #{rnn_model_forward.1} parent=0 // pred_check
    _
  $region11: #{rnn_model_forward.1} parent=0 // pred_check_branch
    %17 = sbr.rel (0) target = $region13
  $region12: #{rnn_model_forward.1} parent=0 // pred_region
    _
  $region13: #{rnn_model_forward.1} parent=0 // pred_fallthru
    _
  // Predicated region
  $region14: #{rnn_model_forward.1} parent=0 // pred_check
    _
  $region15: #{rnn_model_forward.1} parent=0 // pred_check_branch
    %19 = sbr.rel (0) target = $region17
  $region16: #{rnn_model_forward.1} parent=0 // pred_region
    _
  $region17: #{rnn_model_forward.1} parent=0 // pred_fallthru
    _
  // Predicated region
  $region18: #{rnn_model_forward.1} parent=0 // pred_check
    _
  $region19: #{rnn_model_forward.1} parent=0 // pred_check_branch
    %21 = sbr.rel (0) target = $region21
  $region20: #{rnn_model_forward.1} parent=0 // pred_region
    _
  $region21: #{rnn_model_forward.1} parent=0 // pred_fallthru
    _
  %v23 = vld [vmem:[%s0] sm:$0xff]
  %v24 = vld [vmem:[%s0 + $0x8] sm:$0xff]
  %v25 = vld [vmem:[%s0 + $0x10] sm:$0xff]
  %v26 = vld [vmem:[%s0 + $0x18] sm:$0xff]
  %v27 = vld [vmem:[%s0 + $0x20] sm:$0xff]
  %v28 = vld [vmem:[%s0 + $0x28] sm:$0xff]
  %v29 = vld [vmem:[%s0 + $0x30] sm:$0xff]
  %v30 = vld [vmem:[%s0 + $0x38] sm:$0xff]
  %v31 = vld [vmem:[%s0 + $0x40] sm:$0xff]
  %v32 = vld [vmem:[%s0 + $0x48] sm:$0xff]
  %v33 = vld [vmem:[%s1] sm:$0x1f]
  %vm34 = vcmask 39936
  %v36 = vsel %vm34, %v23, 0
  %v39 = vsel %vm34, %v24, 0
  %v42 = vsel %vm34, %v25, 0
  %v45 = vsel %vm34, %v26, 0
  %v48 = vsel %vm34, %v27, 0
  %v51 = vsel %vm34, %v28, 0
  %v54 = vsel %vm34, %v29, 0
  %v57 = vsel %vm34, %v30, 0
  %v60 = vsel %vm34, %v31, 0
  %v63 = vsel %vm34, %v32, 0
  %vm65 = vcmask 1044480
  %v67 = vsel %vm65, %v33, 0
  %69 = vmatprep.subr.mxu0 0.0
  %v70 = vand.u32 %v67, 4294901760
  %71 = vmatpush1.msra.mxu0 %v70
  %72 = vmatprep.subr.mxu0 0.0
  %73 = vmatpush1.msra.mxu0 0.0
  %74 = vmatprep.subr.mxu0 0.0
  %75 = vmatpush1.msra.mxu0 0.0
  %76 = vmatprep.subr.mxu0 0.0
  %77 = vmatpush1.msra.mxu0 0.0
  %78 = vmatprep.subr.mxu0 0.0
  %79 = vmatpush1.msra.mxu0 0.0
  %80 = vmatprep.subr.mxu0 0.0
  %81 = vmatpush1.msra.mxu0 0.0
  %82 = vmatprep.subr.mxu0 0.0
  %83 = vmatpush1.msra.mxu0 0.0
  %84 = vmatprep.subr.mxu0 0.0
  %85 = vmatpush1.msra.mxu0 0.0
  %86 = vmatprep.subr.mxu0 0.0
  %87 = vmatpush1.msra.mxu0 0.0
  %88 = vmatprep.subr.mxu0 0.0
  %89 = vmatpush1.msra.mxu0 0.0
  %90 = vmatprep.subr.mxu0 0.0
  %91 = vmatpush1.msra.mxu0 0.0
  %92 = vmatprep.subr.mxu0 0.0
  %93 = vmatpush1.msra.mxu0 0.0
  %94 = vmatprep.subr.mxu0 0.0
  %95 = vmatpush1.msra.mxu0 0.0
  %96 = vmatprep.subr.mxu0 0.0
  %97 = vmatpush1.msra.mxu0 0.0
  %98 = vmatprep.subr.mxu0 0.0
  %99 = vmatpush1.msra.mxu0 0.0
  %100 = vmatprep.subr.mxu0 0.0
  %101 = vmatpush1.msra.mxu0 0.0
  %102 = vmatprep.subr.mxu0 0.0
  %103 = vmatpush1.msra.mxu0 0.0
  %104 = vmatprep.subr.mxu0 0.0
  %105 = vmatpush1.msra.mxu0 0.0
  %106 = vmatprep.subr.mxu0 0.0
  %107 = vmatpush1.msra.mxu0 0.0
  %108 = vmatprep.subr.mxu0 0.0
  %109 = vmatpush1.msra.mxu0 0.0
  %110 = vmatprep.subr.mxu0 0.0
  %111 = vmatpush1.msra.mxu0 0.0
  %112 = vmatprep.subr.mxu0 0.0
  %113 = vmatpush1.msra.mxu0 0.0
  %114 = vmatprep.subr.mxu0 0.0
  %115 = vmatpush1.msra.mxu0 0.0
  %116 = vmatprep.subr.mxu0 0.0
  %117 = vmatpush1.msra.mxu0 0.0
  %118 = vmatprep.subr.mxu0 0.0
  %119 = vmatpush1.msra.mxu0 0.0
  %120 = vmatprep.subr.mxu0 0.0
  %121 = vmatpush1.msra.mxu0 0.0
  %122 = vmatprep.subr.mxu0 0.0
  %123 = vmatpush1.msra.mxu0 0.0
  %124 = vmatprep.subr.mxu0 0.0
  %125 = vmatpush1.msra.mxu0 0.0
  %126 = vmatprep.subr.mxu0 0.0
  %127 = vmatpush1.msra.mxu0 0.0
  %128 = vmatprep.subr.mxu0 0.0
  %129 = vmatpush1.msra.mxu0 0.0
  %130 = vmatprep.subr.mxu0 0.0
  %131 = vmatpush1.msra.mxu0 0.0
  %132 = vmatprep.subr.mxu0 0.0
  %133 = vmatpush1.msra.mxu0 0.0
  %134 = vmatprep.mubr.f32.mxu0 0.0
  %v135 = vand.u32 %v36, 4294901760
  %v136 = vsub.f32 %v36, %v135
  %v137 = vand.u32 %v136, 4294901760
  %v138 = vsub.f32 %v136, %v137
  %v139 = vand.u32 %v138, 4294901760
  %140 = vmatmul.mubr.f32.gmra.mrb[0].mxu0 %v139
  %v141 = vpop.f32.mrb[0].mxu0
  %v142 = vadd.f32 0.0, %v141
  %v143 = vpop.f32.mrb[0].mxu0
  %144 = vmatprep.mubr.f32.mxu0 0.0
  %v145 = vand.u32 %v39, 4294901760
  %v146 = vsub.f32 %v39, %v145
  %v147 = vand.u32 %v146, 4294901760
  %v148 = vsub.f32 %v146, %v147
  %v149 = vand.u32 %v148, 4294901760
  %150 = vmatmul.mubr.f32.gmra.mrb[0].mxu0 %v149
  %v151 = vpop.f32.mrb[0].mxu0
  %v152 = vadd.f32 0.0, %v151
  %v153 = vpop.f32.mrb[0].mxu0
  %154 = vmatprep.mubr.f32.mxu0 0.0
  %v155 = vand.u32 %v42, 4294901760
  %v156 = vsub.f32 %v42, %v155
  %v157 = vand.u32 %v156, 4294901760
  %v158 = vsub.f32 %v156, %v157
  %v159 = vand.u32 %v158, 4294901760
  %160 = vmatmul.mubr.f32.gmra.mrb[0].mxu0 %v159
  %v161 = vpop.f32.mrb[0].mxu0
  %v162 = vadd.f32 0.0, %v161
  %v163 = vpop.f32.mrb[0].mxu0
  %164 = vmatprep.mubr.f32.mxu0 0.0
  %v165 = vand.u32 %v45, 4294901760
  %v166 = vsub.f32 %v45, %v165
  %v167 = vand.u32 %v166, 4294901760
  %v168 = vsub.f32 %v166, %v167
  %v169 = vand.u32 %v168, 4294901760
  %170 = vmatmul.mubr.f32.gmra.mrb[0].mxu0 %v169
  %v171 = vpop.f32.mrb[0].mxu0
  %v172 = vadd.f32 0.0, %v171
  %v173 = vpop.f32.mrb[0].mxu0
  %174 = vmatprep.mubr.f32.mxu0 0.0
  %v175 = vand.u32 %v48, 4294901760
  %v176 = vsub.f32 %v48, %v175
  %v177 = vand.u32 %v176, 4294901760
  %v178 = vsub.f32 %v176, %v177
  %v179 = vand.u32 %v178, 4294901760
  %180 = vmatmul.mubr.f32.gmra.mrb[0].mxu0 %v179
  %v181 = vpop.f32.mrb[0].mxu0
  %v182 = vadd.f32 0.0, %v181
  %v183 = vpop.f32.mrb[0].mxu0
  %184 = vmatprep.mubr.f32.mxu0 0.0
  %v185 = vand.u32 %v51, 4294901760
  %v186 = vsub.f32 %v51, %v185
  %v187 = vand.u32 %v186, 4294901760
  %v188 = vsub.f32 %v186, %v187
  %v189 = vand.u32 %v188, 4294901760
  %190 = vmatmul.mubr.f32.gmra.mrb[0].mxu0 %v189
  %v191 = vpop.f32.mrb[0].mxu0
  %v192 = vadd.f32 0.0, %v191
  %v193 = vpop.f32.mrb[0].mxu0
  %194 = vmatprep.mubr.f32.mxu0 0.0
  %v195 = vand.u32 %v54, 4294901760
  %v196 = vsub.f32 %v54, %v195
  %v197 = vand.u32 %v196, 4294901760
  %v198 = vsub.f32 %v196, %v197
  %v199 = vand.u32 %v198, 4294901760
  %200 = vmatmul.mubr.f32.gmra.mrb[0].mxu0 %v199
  %v201 = vpop.f32.mrb[0].mxu0
  %v202 = vadd.f32 0.0, %v201
  %v203 = vpop.f32.mrb[0].mxu0
  %204 = vmatprep.mubr.f32.mxu0 0.0
  %v205 = vand.u32 %v57, 4294901760
  %v206 = vsub.f32 %v57, %v205
  %v207 = vand.u32 %v206, 4294901760
  %v208 = vsub.f32 %v206, %v207
  %v209 = vand.u32 %v208, 4294901760
  %210 = vmatmul.mubr.f32.gmra.mrb[0].mxu0 %v209
  %v211 = vpop.f32.mrb[0].mxu0
  %v212 = vadd.f32 0.0, %v211
  %v213 = vpop.f32.mrb[0].mxu0
  %214 = vmatprep.mubr.f32.mxu0 0.0
  %v215 = vand.u32 %v60, 4294901760
  %v216 = vsub.f32 %v60, %v215
  %v217 = vand.u32 %v216, 4294901760
  %v218 = vsub.f32 %v216, %v217
  %v219 = vand.u32 %v218, 4294901760
  %220 = vmatmul.mubr.f32.gmra.mrb[0].mxu0 %v219
  %v221 = vpop.f32.mrb[0].mxu0
  %v222 = vadd.f32 0.0, %v221
  %v223 = vpop.f32.mrb[0].mxu0
  %224 = vmatprep.mubr.f32.mxu0 0.0
  %v225 = vand.u32 %v63, 4294901760
  %v226 = vsub.f32 %v63, %v225
  %v227 = vand.u32 %v226, 4294901760
  %v228 = vsub.f32 %v226, %v227
  %v229 = vand.u32 %v228, 4294901760
  %230 = vmatmul.mubr.f32.gmra.mrb[0].mxu0 %v229
  %v231 = vpop.f32.mrb[0].mxu0
  %v232 = vadd.f32 0.0, %v231
  %v233 = vpop.f32.mrb[0].mxu0
  %234 = vdwg.mxu0
  %235 = vmatprep.subr.mxu0 0.0
  %v236 = vand.u32 %v67, 4294901760
  %v237 = vsub.f32 %v67, %v236
  %v238 = vand.u32 %v237, 4294901760
  %v239 = vsub.f32 %v237, %v238
  %v240 = vand.u32 %v239, 4294901760
  %241 = vmatpush1.msra.mxu0 %v240
  %242 = vmatprep.subr.mxu0 0.0
  %243 = vmatpush1.msra.mxu0 0.0
  %244 = vmatprep.subr.mxu0 0.0
  %245 = vmatpush1.msra.mxu0 0.0
  %246 = vmatprep.subr.mxu0 0.0
  %247 = vmatpush1.msra.mxu0 0.0
  %248 = vmatprep.subr.mxu0 0.0
  %249 = vmatpush1.msra.mxu0 0.0
  %250 = vmatprep.subr.mxu0 0.0
  %251 = vmatpush1.msra.mxu0 0.0
  %252 = vmatprep.subr.mxu0 0.0
  %253 = vmatpush1.msra.mxu0 0.0
  %254 = vmatprep.subr.mxu0 0.0
  %255 = vmatpush1.msra.mxu0 0.0
  %256 = vmatprep.subr.mxu0 0.0
  %257 = vmatpush1.msra.mxu0 0.0
  %258 = vmatprep.subr.mxu0 0.0
  %259 = vmatpush1.msra.mxu0 0.0
  %260 = vmatprep.subr.mxu0 0.0
  %261 = vmatpush1.msra.mxu0 0.0
  %262 = vmatprep.subr.mxu0 0.0
  %263 = vmatpush1.msra.mxu0 0.0
  %264 = vmatprep.subr.mxu0 0.0
  %265 = vmatpush1.msra.mxu0 0.0
  %266 = vmatprep.subr.mxu0 0.0
  %267 = vmatpush1.msra.mxu0 0.0
  %268 = vmatprep.subr.mxu0 0.0
  %269 = vmatpush1.msra.mxu0 0.0
  %270 = vmatprep.subr.mxu0 0.0
  %271 = vmatpush1.msra.mxu0 0.0
  %272 = vmatprep.subr.mxu0 0.0
  %273 = vmatpush1.msra.mxu0 0.0
  %274 = vmatprep.subr.mxu0 0.0
  %275 = vmatpush1.msra.mxu0 0.0
  %276 = vmatprep.subr.mxu0 0.0
  %277 = vmatpush1.msra.mxu0 0.0
  %278 = vmatprep.subr.mxu0 0.0
  %279 = vmatpush1.msra.mxu0 0.0
  %280 = vmatprep.subr.mxu0 0.0
  %281 = vmatpush1.msra.mxu0 0.0
  %282 = vmatprep.subr.mxu0 0.0
  %283 = vmatpush1.msra.mxu0 0.0
  %284 = vmatprep.subr.mxu0 0.0
  %285 = vmatpush1.msra.mxu0 0.0
  %286 = vmatprep.subr.mxu0 0.0
  %287 = vmatpush1.msra.mxu0 0.0
  %288 = vmatprep.subr.mxu0 0.0
  %289 = vmatpush1.msra.mxu0 0.0
  %290 = vmatprep.subr.mxu0 0.0
  %291 = vmatpush1.msra.mxu0 0.0
  %292 = vmatprep.subr.mxu0 0.0
  %293 = vmatpush1.msra.mxu0 0.0
  %294 = vmatprep.subr.mxu0 0.0
  %295 = vmatpush1.msra.mxu0 0.0
  %296 = vmatprep.subr.mxu0 0.0
  %297 = vmatpush1.msra.mxu0 0.0
  %298 = vmatprep.subr.mxu0 0.0
  %299 = vmatpush1.msra.mxu0 0.0
  %300 = vmatprep.subr.mxu0 0.0
  %301 = vmatpush1.msra.mxu0 0.0
  %302 = vmatprep.subr.mxu0 0.0
  %303 = vmatpush1.msra.mxu0 0.0
  %304 = vmatprep.mubr.f32.mxu0 0.0
  %v305 = vand.u32 %v36, 4294901760
  %306 = vmatmul.mubr.f32.gmra.mrb[0].mxu0 %v305
  %v307 = vpop.f32.mrb[0].mxu0
  %v308 = vadd.f32 %v142, %v307
  %v309 = vpop.f32.mrb[0].mxu0
  %310 = vmatprep.mubr.f32.mxu0 0.0
  %v311 = vand.u32 %v39, 4294901760
  %312 = vmatmul.mubr.f32.gmra.mrb[0].mxu0 %v311
  %v313 = vpop.f32.mrb[0].mxu0
  %v314 = vadd.f32 %v152, %v313
  %v315 = vpop.f32.mrb[0].mxu0
  %316 = vmatprep.mubr.f32.mxu0 0.0
  %v317 = vand.u32 %v42, 4294901760
  %318 = vmatmul.mubr.f32.gmra.mrb[0].mxu0 %v317
  %v319 = vpop.f32.mrb[0].mxu0
  %v320 = vadd.f32 %v162, %v319
  %v321 = vpop.f32.mrb[0].mxu0
  %322 = vmatprep.mubr.f32.mxu0 0.0
  %v323 = vand.u32 %v45, 4294901760
  %324 = vmatmul.mubr.f32.gmra.mrb[0].mxu0 %v323
  %v325 = vpop.f32.mrb[0].mxu0
  %v326 = vadd.f32 %v172, %v325
  %v327 = vpop.f32.mrb[0].mxu0
  %328 = vmatprep.mubr.f32.mxu0 0.0
  %v329 = vand.u32 %v48, 4294901760
  %330 = vmatmul.mubr.f32.gmra.mrb[0].mxu0 %v329
  %v331 = vpop.f32.mrb[0].mxu0
  %v332 = vadd.f32 %v182, %v331
  %v333 = vpop.f32.mrb[0].mxu0
  %334 = vmatprep.mubr.f32.mxu0 0.0
  %v335 = vand.u32 %v51, 4294901760
  %336 = vmatmul.mubr.f32.gmra.mrb[0].mxu0 %v335
  %v337 = vpop.f32.mrb[0].mxu0
  %v338 = vadd.f32 %v192, %v337
  %v339 = vpop.f32.mrb[0].mxu0
  %340 = vmatprep.mubr.f32.mxu0 0.0
  %v341 = vand.u32 %v54, 4294901760
  %342 = vmatmul.mubr.f32.gmra.mrb[0].mxu0 %v341
  %v343 = vpop.f32.mrb[0].mxu0
  %v344 = vadd.f32 %v202, %v343
  %v345 = vpop.f32.mrb[0].mxu0
  %346 = vmatprep.mubr.f32.mxu0 0.0
  %v347 = vand.u32 %v57, 4294901760
  %348 = vmatmul.mubr.f32.gmra.mrb[0].mxu0 %v347
  %v349 = vpop.f32.mrb[0].mxu0
  %v350 = vadd.f32 %v212, %v349
  %v351 = vpop.f32.mrb[0].mxu0
  %352 = vmatprep.mubr.f32.mxu0 0.0
  %v353 = vand.u32 %v60, 4294901760
  %354 = vmatmul.mubr.f32.gmra.mrb[0].mxu0 %v353
  %v355 = vpop.f32.mrb[0].mxu0
  %v356 = vadd.f32 %v222, %v355
  %v357 = vpop.f32.mrb[0].mxu0
  %358 = vmatprep.mubr.f32.mxu0 0.0
  %v359 = vand.u32 %v63, 4294901760
  %360 = vmatmul.mubr.f32.gmra.mrb[0].mxu0 %v359
  %v361 = vpop.f32.mrb[0].mxu0
  %v362 = vadd.f32 %v232, %v361
  %v363 = vpop.f32.mrb[0].mxu0
  %364 = vdwg.mxu0
  %365 = vmatprep.subr.mxu0 0.0
  %v366 = vand.u32 %v67, 4294901760
  %v367 = vsub.f32 %v67, %v366
  %368 = vmatpush1.msra.mxu0 %v367
  %369 = vmatprep.subr.mxu0 0.0
  %370 = vmatpush1.msra.mxu0 0.0
  %371 = vmatprep.subr.mxu0 0.0
  %372 = vmatpush1.msra.mxu0 0.0
  %373 = vmatprep.subr.mxu0 0.0
  %374 = vmatpush1.msra.mxu0 0.0
  %375 = vmatprep.subr.mxu0 0.0
  %376 = vmatpush1.msra.mxu0 0.0
  %377 = vmatprep.subr.mxu0 0.0
  %378 = vmatpush1.msra.mxu0 0.0
  %379 = vmatprep.subr.mxu0 0.0
  %380 = vmatpush1.msra.mxu0 0.0
  %381 = vmatprep.subr.mxu0 0.0
  %382 = vmatpush1.msra.mxu0 0.0
  %383 = vmatprep.subr.mxu0 0.0
  %384 = vmatpush1.msra.mxu0 0.0
  %385 = vmatprep.subr.mxu0 0.0
  %386 = vmatpush1.msra.mxu0 0.0
  %387 = vmatprep.subr.mxu0 0.0
  %388 = vmatpush1.msra.mxu0 0.0
  %389 = vmatprep.subr.mxu0 0.0
  %390 = vmatpush1.msra.mxu0 0.0
  %391 = vmatprep.subr.mxu0 0.0
  %392 = vmatpush1.msra.mxu0 0.0
  %393 = vmatprep.subr.mxu0 0.0
  %394 = vmatpush1.msra.mxu0 0.0
  %395 = vmatprep.subr.mxu0 0.0
  %396 = vmatpush1.msra.mxu0 0.0
  %397 = vmatprep.subr.mxu0 0.0
  %398 = vmatpush1.msra.mxu0 0.0
  %399 = vmatprep.subr.mxu0 0.0
  %400 = vmatpush1.msra.mxu0 0.0
  %401 = vmatprep.subr.mxu0 0.0
  %402 = vmatpush1.msra.mxu0 0.0
  %403 = vmatprep.subr.mxu0 0.0
  %404 = vmatpush1.msra.mxu0 0.0
  %405 = vmatprep.subr.mxu0 0.0
  %406 = vmatpush1.msra.mxu0 0.0
  %407 = vmatprep.subr.mxu0 0.0
  %408 = vmatpush1.msra.mxu0 0.0
  %409 = vmatprep.subr.mxu0 0.0
  %410 = vmatpush1.msra.mxu0 0.0
  %411 = vmatprep.subr.mxu0 0.0
  %412 = vmatpush1.msra.mxu0 0.0
  %413 = vmatprep.subr.mxu0 0.0
  %414 = vmatpush1.msra.mxu0 0.0
  %415 = vmatprep.subr.mxu0 0.0
  %416 = vmatpush1.msra.mxu0 0.0
  %417 = vmatprep.subr.mxu0 0.0
  %418 = vmatpush1.msra.mxu0 0.0
  %419 = vmatprep.subr.mxu0 0.0
  %420 = vmatpush1.msra.mxu0 0.0
  %421 = vmatprep.subr.mxu0 0.0
  %422 = vmatpush1.msra.mxu0 0.0
  %423 = vmatprep.subr.mxu0 0.0
  %424 = vmatpush1.msra.mxu0 0.0
  %425 = vmatprep.subr.mxu0 0.0
  %426 = vmatpush1.msra.mxu0 0.0
  %427 = vmatprep.subr.mxu0 0.0
  %428 = vmatpush1.msra.mxu0 0.0
  %429 = vmatprep.subr.mxu0 0.0
  %430 = vmatpush1.msra.mxu0 0.0
  %431 = vmatprep.mubr.f32.mxu0 0.0
  %v432 = vand.u32 %v36, 4294901760
  %v433 = vsub.f32 %v36, %v432
  %434 = vmatmul.mubr.f32.gmra.mrb[0].mxu0 %v433
  %v435 = vpop.f32.mrb[0].mxu0
  %v436 = vadd.f32 %v308, %v435
  %v437 = vpop.f32.mrb[0].mxu0
  %438 = vmatprep.mubr.f32.mxu0 0.0
  %v439 = vand.u32 %v39, 4294901760
  %v440 = vsub.f32 %v39, %v439
  %441 = vmatmul.mubr.f32.gmra.mrb[0].mxu0 %v440
  %v442 = vpop.f32.mrb[0].mxu0
  %v443 = vadd.f32 %v314, %v442
  %v444 = vpop.f32.mrb[0].mxu0
  %445 = vmatprep.mubr.f32.mxu0 0.0
  %v446 = vand.u32 %v42, 4294901760
  %v447 = vsub.f32 %v42, %v446
  %448 = vmatmul.mubr.f32.gmra.mrb[0].mxu0 %v447
  %v449 = vpop.f32.mrb[0].mxu0
  %v450 = vadd.f32 %v320, %v449
  %v451 = vpop.f32.mrb[0].mxu0
  %452 = vmatprep.mubr.f32.mxu0 0.0
  %v453 = vand.u32 %v45, 4294901760
  %v454 = vsub.f32 %v45, %v453
  %455 = vmatmul.mubr.f32.gmra.mrb[0].mxu0 %v454
  %v456 = vpop.f32.mrb[0].mxu0
  %v457 = vadd.f32 %v326, %v456
  %v458 = vpop.f32.mrb[0].mxu0
  %459 = vmatprep.mubr.f32.mxu0 0.0
  %v460 = vand.u32 %v48, 4294901760
  %v461 = vsub.f32 %v48, %v460
  %462 = vmatmul.mubr.f32.gmra.mrb[0].mxu0 %v461
  %v463 = vpop.f32.mrb[0].mxu0
  %v464 = vadd.f32 %v332, %v463
  %v465 = vpop.f32.mrb[0].mxu0
  %466 = vmatprep.mubr.f32.mxu0 0.0
  %v467 = vand.u32 %v51, 4294901760
  %v468 = vsub.f32 %v51, %v467
  %469 = vmatmul.mubr.f32.gmra.mrb[0].mxu0 %v468
  %v470 = vpop.f32.mrb[0].mxu0
  %v471 = vadd.f32 %v338, %v470
  %v472 = vpop.f32.mrb[0].mxu0
  %473 = vmatprep.mubr.f32.mxu0 0.0
  %v474 = vand.u32 %v54, 4294901760
  %v475 = vsub.f32 %v54, %v474
  %476 = vmatmul.mubr.f32.gmra.mrb[0].mxu0 %v475
  %v477 = vpop.f32.mrb[0].mxu0
  %v478 = vadd.f32 %v344, %v477
  %v479 = vpop.f32.mrb[0].mxu0
  %480 = vmatprep.mubr.f32.mxu0 0.0
  %v481 = vand.u32 %v57, 4294901760
  %v482 = vsub.f32 %v57, %v481
  %483 = vmatmul.mubr.f32.gmra.mrb[0].mxu0 %v482
  %v484 = vpop.f32.mrb[0].mxu0
  %v485 = vadd.f32 %v350, %v484
  %v486 = vpop.f32.mrb[0].mxu0
  %487 = vmatprep.mubr.f32.mxu0 0.0
  %v488 = vand.u32 %v60, 4294901760
  %v489 = vsub.f32 %v60, %v488
  %490 = vmatmul.mubr.f32.gmra.mrb[0].mxu0 %v489
  %v491 = vpop.f32.mrb[0].mxu0
  %v492 = vadd.f32 %v356, %v491
  %v493 = vpop.f32.mrb[0].mxu0
  %494 = vmatprep.mubr.f32.mxu0 0.0
  %v495 = vand.u32 %v63, 4294901760
  %v496 = vsub.f32 %v63, %v495
  %497 = vmatmul.mubr.f32.gmra.mrb[0].mxu0 %v496
  %v498 = vpop.f32.mrb[0].mxu0
  %v499 = vadd.f32 %v362, %v498
  %v500 = vpop.f32.mrb[0].mxu0
  %501 = vdwg.mxu0
  %502 = vmatprep.subr.mxu0 0.0
  %v503 = vand.u32 %v67, 4294901760
  %504 = vmatpush1.msra.mxu0 %v503
  %505 = vmatprep.subr.mxu0 0.0
  %506 = vmatpush1.msra.mxu0 0.0
  %507 = vmatprep.subr.mxu0 0.0
  %508 = vmatpush1.msra.mxu0 0.0
  %509 = vmatprep.subr.mxu0 0.0
  %510 = vmatpush1.msra.mxu0 0.0
  %511 = vmatprep.subr.mxu0 0.0
  %512 = vmatpush1.msra.mxu0 0.0
  %513 = vmatprep.subr.mxu0 0.0
  %514 = vmatpush1.msra.mxu0 0.0
  %515 = vmatprep.subr.mxu0 0.0
  %516 = vmatpush1.msra.mxu0 0.0
  %517 = vmatprep.subr.mxu0 0.0
  %518 = vmatpush1.msra.mxu0 0.0
  %519 = vmatprep.subr.mxu0 0.0
  %520 = vmatpush1.msra.mxu0 0.0
  %521 = vmatprep.subr.mxu0 0.0
  %522 = vmatpush1.msra.mxu0 0.0
  %523 = vmatprep.subr.mxu0 0.0
  %524 = vmatpush1.msra.mxu0 0.0
  %525 = vmatprep.subr.mxu0 0.0
  %526 = vmatpush1.msra.mxu0 0.0
  %527 = vmatprep.subr.mxu0 0.0
  %528 = vmatpush1.msra.mxu0 0.0
  %529 = vmatprep.subr.mxu0 0.0
  %530 = vmatpush1.msra.mxu0 0.0
  %531 = vmatprep.subr.mxu0 0.0
  %532 = vmatpush1.msra.mxu0 0.0
  %533 = vmatprep.subr.mxu0 0.0
  %534 = vmatpush1.msra.mxu0 0.0
  %535 = vmatprep.subr.mxu0 0.0
  %536 = vmatpush1.msra.mxu0 0.0
  %537 = vmatprep.subr.mxu0 0.0
  %538 = vmatpush1.msra.mxu0 0.0
  %539 = vmatprep.subr.mxu0 0.0
  %540 = vmatpush1.msra.mxu0 0.0
  %541 = vmatprep.subr.mxu0 0.0
  %542 = vmatpush1.msra.mxu0 0.0
  %543 = vmatprep.subr.mxu0 0.0
  %544 = vmatpush1.msra.mxu0 0.0
  %545 = vmatprep.subr.mxu0 0.0
  %546 = vmatpush1.msra.mxu0 0.0
  %547 = vmatprep.subr.mxu0 0.0
  %548 = vmatpush1.msra.mxu0 0.0
  %549 = vmatprep.subr.mxu0 0.0
  %550 = vmatpush1.msra.mxu0 0.0
  %551 = vmatprep.subr.mxu0 0.0
  %552 = vmatpush1.msra.mxu0 0.0
  %553 = vmatprep.subr.mxu0 0.0
  %554 = vmatpush1.msra.mxu0 0.0
  %555 = vmatprep.subr.mxu0 0.0
  %556 = vmatpush1.msra.mxu0 0.0
  %557 = vmatprep.subr.mxu0 0.0
  %558 = vmatpush1.msra.mxu0 0.0
  %559 = vmatprep.subr.mxu0 0.0
  %560 = vmatpush1.msra.mxu0 0.0
  %561 = vmatprep.subr.mxu0 0.0
  %562 = vmatpush1.msra.mxu0 0.0
  %563 = vmatprep.subr.mxu0 0.0
  %564 = vmatpush1.msra.mxu0 0.0
  %565 = vmatprep.subr.mxu0 0.0
  %566 = vmatpush1.msra.mxu0 0.0
  %567 = vmatprep.mubr.f32.mxu0 0.0
  %v568 = vand.u32 %v36, 4294901760
  %v569 = vsub.f32 %v36, %v568
  %v570 = vand.u32 %v569, 4294901760
  %571 = vmatmul.mubr.f32.gmra.mrb[0].mxu0 %v570
  %v572 = vpop.f32.mrb[0].mxu0
  %v573 = vadd.f32 %v436, %v572
  %v574 = vpop.f32.mrb[0].mxu0
  %575 = vmatprep.mubr.f32.mxu0 0.0
  %v576 = vand.u32 %v39, 4294901760
  %v577 = vsub.f32 %v39, %v576
  %v578 = vand.u32 %v577, 4294901760
  %579 = vmatmul.mubr.f32.gmra.mrb[0].mxu0 %v578
  %v580 = vpop.f32.mrb[0].mxu0
  %v581 = vadd.f32 %v443, %v580
  %v582 = vpop.f32.mrb[0].mxu0
  %583 = vmatprep.mubr.f32.mxu0 0.0
  %v584 = vand.u32 %v42, 4294901760
  %v585 = vsub.f32 %v42, %v584
  %v586 = vand.u32 %v585, 4294901760
  %587 = vmatmul.mubr.f32.gmra.mrb[0].mxu0 %v586
  %v588 = vpop.f32.mrb[0].mxu0
  %v589 = vadd.f32 %v450, %v588
  %v590 = vpop.f32.mrb[0].mxu0
  %591 = vmatprep.mubr.f32.mxu0 0.0
  %v592 = vand.u32 %v45, 4294901760
  %v593 = vsub.f32 %v45, %v592
  %v594 = vand.u32 %v593, 4294901760
  %595 = vmatmul.mubr.f32.gmra.mrb[0].mxu0 %v594
  %v596 = vpop.f32.mrb[0].mxu0
  %v597 = vadd.f32 %v457, %v596
  %v598 = vpop.f32.mrb[0].mxu0
  %599 = vmatprep.mubr.f32.mxu0 0.0
  %v600 = vand.u32 %v48, 4294901760
  %v601 = vsub.f32 %v48, %v600
  %v602 = vand.u32 %v601, 4294901760
  %603 = vmatmul.mubr.f32.gmra.mrb[0].mxu0 %v602
  %v604 = vpop.f32.mrb[0].mxu0
  %v605 = vadd.f32 %v464, %v604
  %v606 = vpop.f32.mrb[0].mxu0
  %607 = vmatprep.mubr.f32.mxu0 0.0
  %v608 = vand.u32 %v51, 4294901760
  %v609 = vsub.f32 %v51, %v608
  %v610 = vand.u32 %v609, 4294901760
  %611 = vmatmul.mubr.f32.gmra.mrb[0].mxu0 %v610
  %v612 = vpop.f32.mrb[0].mxu0
  %v613 = vadd.f32 %v471, %v612
  %v614 = vpop.f32.mrb[0].mxu0
  %615 = vmatprep.mubr.f32.mxu0 0.0
  %v616 = vand.u32 %v54, 4294901760
  %v617 = vsub.f32 %v54, %v616
  %v618 = vand.u32 %v617, 4294901760
  %619 = vmatmul.mubr.f32.gmra.mrb[0].mxu0 %v618
  %v620 = vpop.f32.mrb[0].mxu0
  %v621 = vadd.f32 %v478, %v620
  %v622 = vpop.f32.mrb[0].mxu0
  %623 = vmatprep.mubr.f32.mxu0 0.0
  %v624 = vand.u32 %v57, 4294901760
  %v625 = vsub.f32 %v57, %v624
  %v626 = vand.u32 %v625, 4294901760
  %627 = vmatmul.mubr.f32.gmra.mrb[0].mxu0 %v626
  %v628 = vpop.f32.mrb[0].mxu0
  %v629 = vadd.f32 %v485, %v628
  %v630 = vpop.f32.mrb[0].mxu0
  %631 = vmatprep.mubr.f32.mxu0 0.0
  %v632 = vand.u32 %v60, 4294901760
  %v633 = vsub.f32 %v60, %v632
  %v634 = vand.u32 %v633, 4294901760
  %635 = vmatmul.mubr.f32.gmra.mrb[0].mxu0 %v634
  %v636 = vpop.f32.mrb[0].mxu0
  %v637 = vadd.f32 %v492, %v636
  %v638 = vpop.f32.mrb[0].mxu0
  %639 = vmatprep.mubr.f32.mxu0 0.0
  %v640 = vand.u32 %v63, 4294901760
  %v641 = vsub.f32 %v63, %v640
  %v642 = vand.u32 %v641, 4294901760
  %643 = vmatmul.mubr.f32.gmra.mrb[0].mxu0 %v642
  %v644 = vpop.f32.mrb[0].mxu0
  %v645 = vadd.f32 %v499, %v644
  %v646 = vpop.f32.mrb[0].mxu0
  %647 = vdwg.mxu0
  %648 = vmatprep.subr.mxu0 0.0
  %v649 = vand.u32 %v67, 4294901760
  %v650 = vsub.f32 %v67, %v649
  %v651 = vand.u32 %v650, 4294901760
  %652 = vmatpush1.msra.mxu0 %v651
  %653 = vmatprep.subr.mxu0 0.0
  %654 = vmatpush1.msra.mxu0 0.0
  %655 = vmatprep.subr.mxu0 0.0
  %656 = vmatpush1.msra.mxu0 0.0
  %657 = vmatprep.subr.mxu0 0.0
  %658 = vmatpush1.msra.mxu0 0.0
  %659 = vmatprep.subr.mxu0 0.0
  %660 = vmatpush1.msra.mxu0 0.0
  %661 = vmatprep.subr.mxu0 0.0
  %662 = vmatpush1.msra.mxu0 0.0
  %663 = vmatprep.subr.mxu0 0.0
  %664 = vmatpush1.msra.mxu0 0.0
  %665 = vmatprep.subr.mxu0 0.0
  %666 = vmatpush1.msra.mxu0 0.0
  %667 = vmatprep.subr.mxu0 0.0
  %668 = vmatpush1.msra.mxu0 0.0
  %669 = vmatprep.subr.mxu0 0.0
  %670 = vmatpush1.msra.mxu0 0.0
  %671 = vmatprep.subr.mxu0 0.0
  %672 = vmatpush1.msra.mxu0 0.0
  %673 = vmatprep.subr.mxu0 0.0
  %674 = vmatpush1.msra.mxu0 0.0
  %675 = vmatprep.subr.mxu0 0.0
  %676 = vmatpush1.msra.mxu0 0.0
  %677 = vmatprep.subr.mxu0 0.0
  %678 = vmatpush1.msra.mxu0 0.0
  %679 = vmatprep.subr.mxu0 0.0
  %680 = vmatpush1.msra.mxu0 0.0
  %681 = vmatprep.subr.mxu0 0.0
  %682 = vmatpush1.msra.mxu0 0.0
  %683 = vmatprep.subr.mxu0 0.0
  %684 = vmatpush1.msra.mxu0 0.0
  %685 = vmatprep.subr.mxu0 0.0
  %686 = vmatpush1.msra.mxu0 0.0
  %687 = vmatprep.subr.mxu0 0.0
  %688 = vmatpush1.msra.mxu0 0.0
  %689 = vmatprep.subr.mxu0 0.0
  %690 = vmatpush1.msra.mxu0 0.0
  %691 = vmatprep.subr.mxu0 0.0
  %692 = vmatpush1.msra.mxu0 0.0
  %693 = vmatprep.subr.mxu0 0.0
  %694 = vmatpush1.msra.mxu0 0.0
  %695 = vmatprep.subr.mxu0 0.0
  %696 = vmatpush1.msra.mxu0 0.0
  %697 = vmatprep.subr.mxu0 0.0
  %698 = vmatpush1.msra.mxu0 0.0
  %699 = vmatprep.subr.mxu0 0.0
  %700 = vmatpush1.msra.mxu0 0.0
  %701 = vmatprep.subr.mxu0 0.0
  %702 = vmatpush1.msra.mxu0 0.0
  %703 = vmatprep.subr.mxu0 0.0
  %704 = vmatpush1.msra.mxu0 0.0
  %705 = vmatprep.subr.mxu0 0.0
  %706 = vmatpush1.msra.mxu0 0.0
  %707 = vmatprep.subr.mxu0 0.0
  %708 = vmatpush1.msra.mxu0 0.0
  %709 = vmatprep.subr.mxu0 0.0
  %710 = vmatpush1.msra.mxu0 0.0
  %711 = vmatprep.subr.mxu0 0.0
  %712 = vmatpush1.msra.mxu0 0.0
  %713 = vmatprep.subr.mxu0 0.0
  %714 = vmatpush1.msra.mxu0 0.0
  %715 = vmatprep.mubr.f32.mxu0 0.0
  %v716 = vand.u32 %v36, 4294901760
  %717 = vmatmul.mubr.f32.gmra.mrb[0].mxu0 %v716
  %v718 = vpop.f32.mrb[0].mxu0
  %v719 = vadd.f32 %v573, %v718
  %v720 = vpop.f32.mrb[0].mxu0
  %721 = vmatprep.mubr.f32.mxu0 0.0
  %v722 = vand.u32 %v39, 4294901760
  %723 = vmatmul.mubr.f32.gmra.mrb[0].mxu0 %v722
  %v724 = vpop.f32.mrb[0].mxu0
  %v725 = vadd.f32 %v581, %v724
  %v726 = vpop.f32.mrb[0].mxu0
  %727 = vmatprep.mubr.f32.mxu0 0.0
  %v728 = vand.u32 %v42, 4294901760
  %729 = vmatmul.mubr.f32.gmra.mrb[0].mxu0 %v728
  %v730 = vpop.f32.mrb[0].mxu0
  %v731 = vadd.f32 %v589, %v730
  %v732 = vpop.f32.mrb[0].mxu0
  %733 = vmatprep.mubr.f32.mxu0 0.0
  %v734 = vand.u32 %v45, 4294901760
  %735 = vmatmul.mubr.f32.gmra.mrb[0].mxu0 %v734
  %v736 = vpop.f32.mrb[0].mxu0
  %v737 = vadd.f32 %v597, %v736
  %v738 = vpop.f32.mrb[0].mxu0
  %739 = vmatprep.mubr.f32.mxu0 0.0
  %v740 = vand.u32 %v48, 4294901760
  %741 = vmatmul.mubr.f32.gmra.mrb[0].mxu0 %v740
  %v742 = vpop.f32.mrb[0].mxu0
  %v743 = vadd.f32 %v605, %v742
  %v744 = vpop.f32.mrb[0].mxu0
  %745 = vmatprep.mubr.f32.mxu0 0.0
  %v746 = vand.u32 %v51, 4294901760
  %747 = vmatmul.mubr.f32.gmra.mrb[0].mxu0 %v746
  %v748 = vpop.f32.mrb[0].mxu0
  %v749 = vadd.f32 %v613, %v748
  %v750 = vpop.f32.mrb[0].mxu0
  %751 = vmatprep.mubr.f32.mxu0 0.0
  %v752 = vand.u32 %v54, 4294901760
  %753 = vmatmul.mubr.f32.gmra.mrb[0].mxu0 %v752
  %v754 = vpop.f32.mrb[0].mxu0
  %v755 = vadd.f32 %v621, %v754
  %v756 = vpop.f32.mrb[0].mxu0
  %757 = vmatprep.mubr.f32.mxu0 0.0
  %v758 = vand.u32 %v57, 4294901760
  %759 = vmatmul.mubr.f32.gmra.mrb[0].mxu0 %v758
  %v760 = vpop.f32.mrb[0].mxu0
  %v761 = vadd.f32 %v629, %v760
  %v762 = vpop.f32.mrb[0].mxu0
  %763 = vmatprep.mubr.f32.mxu0 0.0
  %v764 = vand.u32 %v60, 4294901760
  %765 = vmatmul.mubr.f32.gmra.mrb[0].mxu0 %v764
  %v766 = vpop.f32.mrb[0].mxu0
  %v767 = vadd.f32 %v637, %v766
  %v768 = vpop.f32.mrb[0].mxu0
  %769 = vmatprep.mubr.f32.mxu0 0.0
  %v770 = vand.u32 %v63, 4294901760
  %771 = vmatmul.mubr.f32.gmra.mrb[0].mxu0 %v770
  %v772 = vpop.f32.mrb[0].mxu0
  %v773 = vadd.f32 %v645, %v772
  %v774 = vpop.f32.mrb[0].mxu0
  %775 = vdwg.mxu0
  %776 = vmatprep.subr.mxu0 0.0
  %v777 = vand.u32 %v67, 4294901760
  %778 = vmatpush1.msra.mxu0 %v777
  %779 = vmatprep.subr.mxu0 0.0
  %780 = vmatpush1.msra.mxu0 0.0
  %781 = vmatprep.subr.mxu0 0.0
  %782 = vmatpush1.msra.mxu0 0.0
  %783 = vmatprep.subr.mxu0 0.0
  %784 = vmatpush1.msra.mxu0 0.0
  %785 = vmatprep.subr.mxu0 0.0
  %786 = vmatpush1.msra.mxu0 0.0
  %787 = vmatprep.subr.mxu0 0.0
  %788 = vmatpush1.msra.mxu0 0.0
  %789 = vmatprep.subr.mxu0 0.0
  %790 = vmatpush1.msra.mxu0 0.0
  %791 = vmatprep.subr.mxu0 0.0
  %792 = vmatpush1.msra.mxu0 0.0
  %793 = vmatprep.subr.mxu0 0.0
  %794 = vmatpush1.msra.mxu0 0.0
  %795 = vmatprep.subr.mxu0 0.0
  %796 = vmatpush1.msra.mxu0 0.0
  %797 = vmatprep.subr.mxu0 0.0
  %798 = vmatpush1.msra.mxu0 0.0
  %799 = vmatprep.subr.mxu0 0.0
  %800 = vmatpush1.msra.mxu0 0.0
  %801 = vmatprep.subr.mxu0 0.0
  %802 = vmatpush1.msra.mxu0 0.0
  %803 = vmatprep.subr.mxu0 0.0
  %804 = vmatpush1.msra.mxu0 0.0
  %805 = vmatprep.subr.mxu0 0.0
  %806 = vmatpush1.msra.mxu0 0.0
  %807 = vmatprep.subr.mxu0 0.0
  %808 = vmatpush1.msra.mxu0 0.0
  %809 = vmatprep.subr.mxu0 0.0
  %810 = vmatpush1.msra.mxu0 0.0
  %811 = vmatprep.subr.mxu0 0.0
  %812 = vmatpush1.msra.mxu0 0.0
  %813 = vmatprep.subr.mxu0 0.0
  %814 = vmatpush1.msra.mxu0 0.0
  %815 = vmatprep.subr.mxu0 0.0
  %816 = vmatpush1.msra.mxu0 0.0
  %817 = vmatprep.subr.mxu0 0.0
  %818 = vmatpush1.msra.mxu0 0.0
  %819 = vmatprep.subr.mxu0 0.0
  %820 = vmatpush1.msra.mxu0 0.0
  %821 = vmatprep.subr.mxu0 0.0
  %822 = vmatpush1.msra.mxu0 0.0
  %823 = vmatprep.subr.mxu0 0.0
  %824 = vmatpush1.msra.mxu0 0.0
  %825 = vmatprep.subr.mxu0 0.0
  %826 = vmatpush1.msra.mxu0 0.0
  %827 = vmatprep.subr.mxu0 0.0
  %828 = vmatpush1.msra.mxu0 0.0
  %829 = vmatprep.subr.mxu0 0.0
  %830 = vmatpush1.msra.mxu0 0.0
  %831 = vmatprep.subr.mxu0 0.0
  %832 = vmatpush1.msra.mxu0 0.0
  %833 = vmatprep.subr.mxu0 0.0
  %834 = vmatpush1.msra.mxu0 0.0
  %835 = vmatprep.subr.mxu0 0.0
  %836 = vmatpush1.msra.mxu0 0.0
  %837 = vmatprep.subr.mxu0 0.0
  %838 = vmatpush1.msra.mxu0 0.0
  %839 = vmatprep.subr.mxu0 0.0
  %840 = vmatpush1.msra.mxu0 0.0
  %841 = vmatprep.mubr.f32.mxu0 0.0
  %v842 = vand.u32 %v36, 4294901760
  %843 = vmatmul.mubr.f32.gmra.mrb[0].mxu0 %v842
  %v844 = vpop.f32.mrb[0].mxu0
  %v845 = vadd.f32 %v719, %v844
  %v846 = vpop.f32.mrb[0].mxu0
  %847 = vmatprep.mubr.f32.mxu0 0.0
  %v848 = vand.u32 %v39, 4294901760
  %849 = vmatmul.mubr.f32.gmra.mrb[0].mxu0 %v848
  %v850 = vpop.f32.mrb[0].mxu0
  %v851 = vadd.f32 %v725, %v850
  %v852 = vpop.f32.mrb[0].mxu0
  %853 = vmatprep.mubr.f32.mxu0 0.0
  %v854 = vand.u32 %v42, 4294901760
  %855 = vmatmul.mubr.f32.gmra.mrb[0].mxu0 %v854
  %v856 = vpop.f32.mrb[0].mxu0
  %v857 = vadd.f32 %v731, %v856
  %v858 = vpop.f32.mrb[0].mxu0
  %859 = vmatprep.mubr.f32.mxu0 0.0
  %v860 = vand.u32 %v45, 4294901760
  %861 = vmatmul.mubr.f32.gmra.mrb[0].mxu0 %v860
  %v862 = vpop.f32.mrb[0].mxu0
  %v863 = vadd.f32 %v737, %v862
  %v864 = vpop.f32.mrb[0].mxu0
  %865 = vmatprep.mubr.f32.mxu0 0.0
  %v866 = vand.u32 %v48, 4294901760
  %867 = vmatmul.mubr.f32.gmra.mrb[0].mxu0 %v866
  %v868 = vpop.f32.mrb[0].mxu0
  %v869 = vadd.f32 %v743, %v868
  %v870 = vpop.f32.mrb[0].mxu0
  %871 = vmatprep.mubr.f32.mxu0 0.0
  %v872 = vand.u32 %v51, 4294901760
  %873 = vmatmul.mubr.f32.gmra.mrb[0].mxu0 %v872
  %v874 = vpop.f32.mrb[0].mxu0
  %v875 = vadd.f32 %v749, %v874
  %v876 = vpop.f32.mrb[0].mxu0
  %877 = vmatprep.mubr.f32.mxu0 0.0
  %v878 = vand.u32 %v54, 4294901760
  %879 = vmatmul.mubr.f32.gmra.mrb[0].mxu0 %v878
  %v880 = vpop.f32.mrb[0].mxu0
  %v881 = vadd.f32 %v755, %v880
  %v882 = vpop.f32.mrb[0].mxu0
  %883 = vmatprep.mubr.f32.mxu0 0.0
  %v884 = vand.u32 %v57, 4294901760
  %885 = vmatmul.mubr.f32.gmra.mrb[0].mxu0 %v884
  %v886 = vpop.f32.mrb[0].mxu0
  %v887 = vadd.f32 %v761, %v886
  %v888 = vpop.f32.mrb[0].mxu0
  %889 = vmatprep.mubr.f32.mxu0 0.0
  %v890 = vand.u32 %v60, 4294901760
  %891 = vmatmul.mubr.f32.gmra.mrb[0].mxu0 %v890
  %v892 = vpop.f32.mrb[0].mxu0
  %v893 = vadd.f32 %v767, %v892
  %v894 = vpop.f32.mrb[0].mxu0
  %895 = vmatprep.mubr.f32.mxu0 0.0
  %v896 = vand.u32 %v63, 4294901760
  %897 = vmatmul.mubr.f32.gmra.mrb[0].mxu0 %v896
  %v898 = vpop.f32.mrb[0].mxu0
  %v899 = vadd.f32 %v773, %v898
  %v900 = vpop.f32.mrb[0].mxu0
  %901 = vdwg.mxu0
  %v902 = vld [vmem:[%s2] sm:$0xf]
  %v903 = vld [vmem:[%s2 + $0x4] sm:$0xf]
  %v904 = vld [vmem:[%s2 + $0x8] sm:$0xf]
  %v905 = vld [vmem:[%s2 + $0xc] sm:$0xf]
  %v906 = vld [vmem:[%s2 + $0x10] sm:$0x3]
  %v912 = vunpack.c.l.b16 %v902
  %v913 = vunpack.c.l.b16 %v903
  %v914 = vunpack.c.l.b16 %v904
  %v915 = vunpack.c.l.b16 %v905
  %v916 = vunpack.c.l.b16 %v906
  %v917 = vpack.c.b16 %v913, %v912
  %v918 = vpack.c.b16 %v915, %v914
  %v919 = vpack.c.b16 %v916, %v916
  %vm922 = vcmask 293888
  %v924 = vsel %vm922, 0, 0
  %vm926 = vcmask 1041408
  %v928 = vsel %vm926, %v919, 0
  %930 = vmatprep.subr.bf16.mxu0 0
  %931 = vmatpush1.bf16.msra.mxu0 %v917
  %932 = vmatprep.subr.bf16.mxu0 0
  %933 = vmatpush1.bf16.msra.mxu0 %v918
  %934 = vmatprep.subr.bf16.mxu0 0
  %935 = vmatpush1.bf16.msra.mxu0 %v928
  %936 = vmatprep.subr.bf16.mxu0 0
  %937 = vmatpush1.bf16.msra.mxu0 0
  %938 = vmatprep.subr.bf16.mxu0 0
  %939 = vmatpush1.bf16.msra.mxu0 0
  %940 = vmatprep.subr.bf16.mxu0 0
  %941 = vmatpush1.bf16.msra.mxu0 0
  %942 = vmatprep.subr.bf16.mxu0 0
  %943 = vmatpush1.bf16.msra.mxu0 0
  %944 = vmatprep.subr.bf16.mxu0 0
  %945 = vmatpush1.bf16.msra.mxu0 0
  %946 = vmatprep.subr.bf16.mxu0 0
  %947 = vmatpush1.bf16.msra.mxu0 0
  %948 = vmatprep.subr.bf16.mxu0 0
  %949 = vmatpush1.bf16.msra.mxu0 0
  %950 = vmatprep.subr.bf16.mxu0 0
  %951 = vmatpush1.bf16.msra.mxu0 0
  %952 = vmatprep.subr.bf16.mxu0 0
  %953 = vmatpush1.bf16.msra.mxu0 0
  %954 = vmatprep.subr.bf16.mxu0 0
  %955 = vmatpush1.bf16.msra.mxu0 0
  %956 = vmatprep.subr.bf16.mxu0 0
  %957 = vmatpush1.bf16.msra.mxu0 0
  %958 = vmatprep.subr.bf16.mxu0 0
  %959 = vmatpush1.bf16.msra.mxu0 0
  %960 = vmatprep.subr.bf16.mxu0 0
  %961 = vmatpush1.bf16.msra.mxu0 0
  %962 = vmatprep.mubr.bf16.mxu0 0
  %963 = vmatmul.mubr.bf16.gmra.mrb[0].mxu0 %v924
  %v964 = vpop.f32.mrb[0].mxu0
  %v965 = vadd.f32 %v845, %v964
  %v966 = vpop.f32.mrb[0].mxu0
  %v967 = vpop.f32.mrb[0].mxu0
  %v968 = vpop.f32.mrb[0].mxu0
  %969 = vdwg.mxu0
  %v970 = vtanh.pop %v965
  %v971 = vpack.c.bf16 %v970, %v970
  %v973 = vsel %vm922, %v971, 0
  %975 = vmatprep.subr.bf16.mxu0 0
  %976 = vmatpush1.bf16.msra.mxu0 %v917
  %977 = vmatprep.subr.bf16.mxu0 0
  %978 = vmatpush1.bf16.msra.mxu0 %v918
  %979 = vmatprep.subr.bf16.mxu0 0
  %980 = vmatpush1.bf16.msra.mxu0 %v928
  %981 = vmatprep.subr.bf16.mxu0 0
  %982 = vmatpush1.bf16.msra.mxu0 0
  %983 = vmatprep.subr.bf16.mxu0 0
  %984 = vmatpush1.bf16.msra.mxu0 0
  %985 = vmatprep.subr.bf16.mxu0 0
  %986 = vmatpush1.bf16.msra.mxu0 0
  %987 = vmatprep.subr.bf16.mxu0 0
  %988 = vmatpush1.bf16.msra.mxu0 0
  %989 = vmatprep.subr.bf16.mxu0 0
  %990 = vmatpush1.bf16.msra.mxu0 0
  %991 = vmatprep.subr.bf16.mxu0 0
  %992 = vmatpush1.bf16.msra.mxu0 0
  %993 = vmatprep.subr.bf16.mxu0 0
  %994 = vmatpush1.bf16.msra.mxu0 0
  %995 = vmatprep.subr.bf16.mxu0 0
  %996 = vmatpush1.bf16.msra.mxu0 0
  %997 = vmatprep.subr.bf16.mxu0 0
  %998 = vmatpush1.bf16.msra.mxu0 0
  %999 = vmatprep.subr.bf16.mxu0 0
  %1000 = vmatpush1.bf16.msra.mxu0 0
  %1001 = vmatprep.subr.bf16.mxu0 0
  %1002 = vmatpush1.bf16.msra.mxu0 0
  %1003 = vmatprep.subr.bf16.mxu0 0
  %1004 = vmatpush1.bf16.msra.mxu0 0
  %1005 = vmatprep.subr.bf16.mxu0 0
  %1006 = vmatpush1.bf16.msra.mxu0 0
  %1007 = vmatprep.mubr.bf16.mxu0 0
  %1008 = vmatmul.mubr.bf16.gmra.mrb[0].mxu0 %v973
  %v1009 = vpop.f32.mrb[0].mxu0
  %v1010 = vadd.f32 %v851, %v1009
  %v1011 = vpop.f32.mrb[0].mxu0
  %v1012 = vpop.f32.mrb[0].mxu0
  %v1013 = vpop.f32.mrb[0].mxu0
  %1014 = vdwg.mxu0
  %v1015 = vtanh.pop %v1010
  %v1016 = vpack.c.bf16 %v1015, %v1015
  %v1018 = vsel %vm922, %v1016, 0
  %1020 = vmatprep.subr.bf16.mxu0 0
  %1021 = vmatpush1.bf16.msra.mxu0 %v917
  %1022 = vmatprep.subr.bf16.mxu0 0
  %1023 = vmatpush1.bf16.msra.mxu0 %v918
  %1024 = vmatprep.subr.bf16.mxu0 0
  %1025 = vmatpush1.bf16.msra.mxu0 %v928
  %1026 = vmatprep.subr.bf16.mxu0 0
  %1027 = vmatpush1.bf16.msra.mxu0 0
  %1028 = vmatprep.subr.bf16.mxu0 0
  %1029 = vmatpush1.bf16.msra.mxu0 0
  %1030 = vmatprep.subr.bf16.mxu0 0
  %1031 = vmatpush1.bf16.msra.mxu0 0
  %1032 = vmatprep.subr.bf16.mxu0 0
  %1033 = vmatpush1.bf16.msra.mxu0 0
  %1034 = vmatprep.subr.bf16.mxu0 0
  %1035 = vmatpush1.bf16.msra.mxu0 0
  %1036 = vmatprep.subr.bf16.mxu0 0
  %1037 = vmatpush1.bf16.msra.mxu0 0
  %1038 = vmatprep.subr.bf16.mxu0 0
  %1039 = vmatpush1.bf16.msra.mxu0 0
  %1040 = vmatprep.subr.bf16.mxu0 0
  %1041 = vmatpush1.bf16.msra.mxu0 0
  %1042 = vmatprep.subr.bf16.mxu0 0
  %1043 = vmatpush1.bf16.msra.mxu0 0
  %1044 = vmatprep.subr.bf16.mxu0 0
  %1045 = vmatpush1.bf16.msra.mxu0 0
  %1046 = vmatprep.subr.bf16.mxu0 0
  %1047 = vmatpush1.bf16.msra.mxu0 0
  %1048 = vmatprep.subr.bf16.mxu0 0
  %1049 = vmatpush1.bf16.msra.mxu0 0
  %1050 = vmatprep.subr.bf16.mxu0 0
  %1051 = vmatpush1.bf16.msra.mxu0 0
  %1052 = vmatprep.mubr.bf16.mxu0 0
  %1053 = vmatmul.mubr.bf16.gmra.mrb[0].mxu0 %v1018
  %v1054 = vpop.f32.mrb[0].mxu0
  %v1055 = vadd.f32 %v857, %v1054
  %v1056 = vpop.f32.mrb[0].mxu0
  %v1057 = vpop.f32.mrb[0].mxu0
  %v1058 = vpop.f32.mrb[0].mxu0
  %1059 = vdwg.mxu0
  %v1060 = vtanh.pop %v1055
  %v1061 = vpack.c.bf16 %v1060, %v1060
  %v1063 = vsel %vm922, %v1061, 0
  %1065 = vmatprep.subr.bf16.mxu0 0
  %1066 = vmatpush1.bf16.msra.mxu0 %v917
  %1067 = vmatprep.subr.bf16.mxu0 0
  %1068 = vmatpush1.bf16.msra.mxu0 %v918
  %1069 = vmatprep.subr.bf16.mxu0 0
  %1070 = vmatpush1.bf16.msra.mxu0 %v928
  %1071 = vmatprep.subr.bf16.mxu0 0
  %1072 = vmatpush1.bf16.msra.mxu0 0
  %1073 = vmatprep.subr.bf16.mxu0 0
  %1074 = vmatpush1.bf16.msra.mxu0 0
  %1075 = vmatprep.subr.bf16.mxu0 0
  %1076 = vmatpush1.bf16.msra.mxu0 0
  %1077 = vmatprep.subr.bf16.mxu0 0
  %1078 = vmatpush1.bf16.msra.mxu0 0
  %1079 = vmatprep.subr.bf16.mxu0 0
  %1080 = vmatpush1.bf16.msra.mxu0 0
  %1081 = vmatprep.subr.bf16.mxu0 0
  %1082 = vmatpush1.bf16.msra.mxu0 0
  %1083 = vmatprep.subr.bf16.mxu0 0
  %1084 = vmatpush1.bf16.msra.mxu0 0
  %1085 = vmatprep.subr.bf16.mxu0 0
  %1086 = vmatpush1.bf16.msra.mxu0 0
  %1087 = vmatprep.subr.bf16.mxu0 0
  %1088 = vmatpush1.bf16.msra.mxu0 0
  %1089 = vmatprep.subr.bf16.mxu0 0
  %1090 = vmatpush1.bf16.msra.mxu0 0
  %1091 = vmatprep.subr.bf16.mxu0 0
  %1092 = vmatpush1.bf16.msra.mxu0 0
  %1093 = vmatprep.subr.bf16.mxu0 0
  %1094 = vmatpush1.bf16.msra.mxu0 0
  %1095 = vmatprep.subr.bf16.mxu0 0
  %1096 = vmatpush1.bf16.msra.mxu0 0
  %1097 = vmatprep.mubr.bf16.mxu0 0
  %1098 = vmatmul.mubr.bf16.gmra.mrb[0].mxu0 %v1063
  %v1099 = vpop.f32.mrb[0].mxu0
  %v1100 = vadd.f32 %v863, %v1099
  %v1101 = vpop.f32.mrb[0].mxu0
  %v1102 = vpop.f32.mrb[0].mxu0
  %v1103 = vpop.f32.mrb[0].mxu0
  %1104 = vdwg.mxu0
  %v1105 = vtanh.pop %v1100
  %v1106 = vpack.c.bf16 %v1105, %v1105
  %v1108 = vsel %vm922, %v1106, 0
  %1110 = vmatprep.subr.bf16.mxu0 0
  %1111 = vmatpush1.bf16.msra.mxu0 %v917
  %1112 = vmatprep.subr.bf16.mxu0 0
  %1113 = vmatpush1.bf16.msra.mxu0 %v918
  %1114 = vmatprep.subr.bf16.mxu0 0
  %1115 = vmatpush1.bf16.msra.mxu0 %v928
  %1116 = vmatprep.subr.bf16.mxu0 0
  %1117 = vmatpush1.bf16.msra.mxu0 0
  %1118 = vmatprep.subr.bf16.mxu0 0
  %1119 = vmatpush1.bf16.msra.mxu0 0
  %1120 = vmatprep.subr.bf16.mxu0 0
  %1121 = vmatpush1.bf16.msra.mxu0 0
  %1122 = vmatprep.subr.bf16.mxu0 0
  %1123 = vmatpush1.bf16.msra.mxu0 0
  %1124 = vmatprep.subr.bf16.mxu0 0
  %1125 = vmatpush1.bf16.msra.mxu0 0
  %1126 = vmatprep.subr.bf16.mxu0 0
  %1127 = vmatpush1.bf16.msra.mxu0 0
  %1128 = vmatprep.subr.bf16.mxu0 0
  %1129 = vmatpush1.bf16.msra.mxu0 0
  %1130 = vmatprep.subr.bf16.mxu0 0
  %1131 = vmatpush1.bf16.msra.mxu0 0
  %1132 = vmatprep.subr.bf16.mxu0 0
  %1133 = vmatpush1.bf16.msra.mxu0 0
  %1134 = vmatprep.subr.bf16.mxu0 0
  %1135 = vmatpush1.bf16.msra.mxu0 0
  %1136 = vmatprep.subr.bf16.mxu0 0
  %1137 = vmatpush1.bf16.msra.mxu0 0
  %1138 = vmatprep.subr.bf16.mxu0 0
  %1139 = vmatpush1.bf16.msra.mxu0 0
  %1140 = vmatprep.subr.bf16.mxu0 0
  %1141 = vmatpush1.bf16.msra.mxu0 0
  %1142 = vmatprep.mubr.bf16.mxu0 0
  %1143 = vmatmul.mubr.bf16.gmra.mrb[0].mxu0 %v1108
  %v1144 = vpop.f32.mrb[0].mxu0
  %v1145 = vadd.f32 %v869, %v1144
  %v1146 = vpop.f32.mrb[0].mxu0
  %v1147 = vpop.f32.mrb[0].mxu0
  %v1148 = vpop.f32.mrb[0].mxu0
  %1149 = vdwg.mxu0
  %v1150 = vtanh.pop %v1145
  %v1151 = vpack.c.bf16 %v1150, %v1150
  %v1153 = vsel %vm922, %v1151, 0
  %1155 = vmatprep.subr.bf16.mxu0 0
  %1156 = vmatpush1.bf16.msra.mxu0 %v917
  %1157 = vmatprep.subr.bf16.mxu0 0
  %1158 = vmatpush1.bf16.msra.mxu0 %v918
  %1159 = vmatprep.subr.bf16.mxu0 0
  %1160 = vmatpush1.bf16.msra.mxu0 %v928
  %1161 = vmatprep.subr.bf16.mxu0 0
  %1162 = vmatpush1.bf16.msra.mxu0 0
  %1163 = vmatprep.subr.bf16.mxu0 0
  %1164 = vmatpush1.bf16.msra.mxu0 0
  %1165 = vmatprep.subr.bf16.mxu0 0
  %1166 = vmatpush1.bf16.msra.mxu0 0
  %1167 = vmatprep.subr.bf16.mxu0 0
  %1168 = vmatpush1.bf16.msra.mxu0 0
  %1169 = vmatprep.subr.bf16.mxu0 0
  %1170 = vmatpush1.bf16.msra.mxu0 0
  %1171 = vmatprep.subr.bf16.mxu0 0
  %1172 = vmatpush1.bf16.msra.mxu0 0
  %1173 = vmatprep.subr.bf16.mxu0 0
  %1174 = vmatpush1.bf16.msra.mxu0 0
  %1175 = vmatprep.subr.bf16.mxu0 0
  %1176 = vmatpush1.bf16.msra.mxu0 0
  %1177 = vmatprep.subr.bf16.mxu0 0
  %1178 = vmatpush1.bf16.msra.mxu0 0
  %1179 = vmatprep.subr.bf16.mxu0 0
  %1180 = vmatpush1.bf16.msra.mxu0 0
  %1181 = vmatprep.subr.bf16.mxu0 0
  %1182 = vmatpush1.bf16.msra.mxu0 0
  %1183 = vmatprep.subr.bf16.mxu0 0
  %1184 = vmatpush1.bf16.msra.mxu0 0
  %1185 = vmatprep.subr.bf16.mxu0 0
  %1186 = vmatpush1.bf16.msra.mxu0 0
  %1187 = vmatprep.mubr.bf16.mxu0 0
  %1188 = vmatmul.mubr.bf16.gmra.mrb[0].mxu0 %v1153
  %v1189 = vpop.f32.mrb[0].mxu0
  %v1190 = vadd.f32 %v875, %v1189
  %v1191 = vpop.f32.mrb[0].mxu0
  %v1192 = vpop.f32.mrb[0].mxu0
  %v1193 = vpop.f32.mrb[0].mxu0
  %1194 = vdwg.mxu0
  %v1195 = vtanh.pop %v1190
  %v1196 = vpack.c.bf16 %v1195, %v1195
  %v1198 = vsel %vm922, %v1196, 0
  %1200 = vmatprep.subr.bf16.mxu0 0
  %1201 = vmatpush1.bf16.msra.mxu0 %v917
  %1202 = vmatprep.subr.bf16.mxu0 0
  %1203 = vmatpush1.bf16.msra.mxu0 %v918
  %1204 = vmatprep.subr.bf16.mxu0 0
  %1205 = vmatpush1.bf16.msra.mxu0 %v928
  %1206 = vmatprep.subr.bf16.mxu0 0
  %1207 = vmatpush1.bf16.msra.mxu0 0
  %1208 = vmatprep.subr.bf16.mxu0 0
  %1209 = vmatpush1.bf16.msra.mxu0 0
  %1210 = vmatprep.subr.bf16.mxu0 0
  %1211 = vmatpush1.bf16.msra.mxu0 0
  %1212 = vmatprep.subr.bf16.mxu0 0
  %1213 = vmatpush1.bf16.msra.mxu0 0
  %1214 = vmatprep.subr.bf16.mxu0 0
  %1215 = vmatpush1.bf16.msra.mxu0 0
  %1216 = vmatprep.subr.bf16.mxu0 0
  %1217 = vmatpush1.bf16.msra.mxu0 0
  %1218 = vmatprep.subr.bf16.mxu0 0
  %1219 = vmatpush1.bf16.msra.mxu0 0
  %1220 = vmatprep.subr.bf16.mxu0 0
  %1221 = vmatpush1.bf16.msra.mxu0 0
  %1222 = vmatprep.subr.bf16.mxu0 0
  %1223 = vmatpush1.bf16.msra.mxu0 0
  %1224 = vmatprep.subr.bf16.mxu0 0
  %1225 = vmatpush1.bf16.msra.mxu0 0
  %1226 = vmatprep.subr.bf16.mxu0 0
  %1227 = vmatpush1.bf16.msra.mxu0 0
  %1228 = vmatprep.subr.bf16.mxu0 0
  %1229 = vmatpush1.bf16.msra.mxu0 0
  %1230 = vmatprep.subr.bf16.mxu0 0
  %1231 = vmatpush1.bf16.msra.mxu0 0
  %1232 = vmatprep.mubr.bf16.mxu0 0
  %1233 = vmatmul.mubr.bf16.gmra.mrb[0].mxu0 %v1198
  %v1234 = vpop.f32.mrb[0].mxu0
  %v1235 = vadd.f32 %v881, %v1234
  %v1236 = vpop.f32.mrb[0].mxu0
  %v1237 = vpop.f32.mrb[0].mxu0
  %v1238 = vpop.f32.mrb[0].mxu0
  %1239 = vdwg.mxu0
  %v1240 = vtanh.pop %v1235
  %v1241 = vpack.c.bf16 %v1240, %v1240
  %v1243 = vsel %vm922, %v1241, 0
  %1245 = vmatprep.subr.bf16.mxu0 0
  %1246 = vmatpush1.bf16.msra.mxu0 %v917
  %1247 = vmatprep.subr.bf16.mxu0 0
  %1248 = vmatpush1.bf16.msra.mxu0 %v918
  %1249 = vmatprep.subr.bf16.mxu0 0
  %1250 = vmatpush1.bf16.msra.mxu0 %v928
  %1251 = vmatprep.subr.bf16.mxu0 0
  %1252 = vmatpush1.bf16.msra.mxu0 0
  %1253 = vmatprep.subr.bf16.mxu0 0
  %1254 = vmatpush1.bf16.msra.mxu0 0
  %1255 = vmatprep.subr.bf16.mxu0 0
  %1256 = vmatpush1.bf16.msra.mxu0 0
  %1257 = vmatprep.subr.bf16.mxu0 0
  %1258 = vmatpush1.bf16.msra.mxu0 0
  %1259 = vmatprep.subr.bf16.mxu0 0
  %1260 = vmatpush1.bf16.msra.mxu0 0
  %1261 = vmatprep.subr.bf16.mxu0 0
  %1262 = vmatpush1.bf16.msra.mxu0 0
  %1263 = vmatprep.subr.bf16.mxu0 0
  %1264 = vmatpush1.bf16.msra.mxu0 0
  %1265 = vmatprep.subr.bf16.mxu0 0
  %1266 = vmatpush1.bf16.msra.mxu0 0
  %1267 = vmatprep.subr.bf16.mxu0 0
  %1268 = vmatpush1.bf16.msra.mxu0 0
  %1269 = vmatprep.subr.bf16.mxu0 0
  %1270 = vmatpush1.bf16.msra.mxu0 0
  %1271 = vmatprep.subr.bf16.mxu0 0
  %1272 = vmatpush1.bf16.msra.mxu0 0
  %1273 = vmatprep.subr.bf16.mxu0 0
  %1274 = vmatpush1.bf16.msra.mxu0 0
  %1275 = vmatprep.subr.bf16.mxu0 0
  %1276 = vmatpush1.bf16.msra.mxu0 0
  %1277 = vmatprep.mubr.bf16.mxu0 0
  %1278 = vmatmul.mubr.bf16.gmra.mrb[0].mxu0 %v1243
  %v1279 = vpop.f32.mrb[0].mxu0
  %v1280 = vadd.f32 %v887, %v1279
  %v1281 = vpop.f32.mrb[0].mxu0
  %v1282 = vpop.f32.mrb[0].mxu0
  %v1283 = vpop.f32.mrb[0].mxu0
  %1284 = vdwg.mxu0
  %v1285 = vtanh.pop %v1280
  %v1286 = vpack.c.bf16 %v1285, %v1285
  %v1288 = vsel %vm922, %v1286, 0
  %1290 = vmatprep.subr.bf16.mxu0 0
  %1291 = vmatpush1.bf16.msra.mxu0 %v917
  %1292 = vmatprep.subr.bf16.mxu0 0
  %1293 = vmatpush1.bf16.msra.mxu0 %v918
  %1294 = vmatprep.subr.bf16.mxu0 0
  %1295 = vmatpush1.bf16.msra.mxu0 %v928
  %1296 = vmatprep.subr.bf16.mxu0 0
  %1297 = vmatpush1.bf16.msra.mxu0 0
  %1298 = vmatprep.subr.bf16.mxu0 0
  %1299 = vmatpush1.bf16.msra.mxu0 0
  %1300 = vmatprep.subr.bf16.mxu0 0
  %1301 = vmatpush1.bf16.msra.mxu0 0
  %1302 = vmatprep.subr.bf16.mxu0 0
  %1303 = vmatpush1.bf16.msra.mxu0 0
  %1304 = vmatprep.subr.bf16.mxu0 0
  %1305 = vmatpush1.bf16.msra.mxu0 0
  %1306 = vmatprep.subr.bf16.mxu0 0
  %1307 = vmatpush1.bf16.msra.mxu0 0
  %1308 = vmatprep.subr.bf16.mxu0 0
  %1309 = vmatpush1.bf16.msra.mxu0 0
  %1310 = vmatprep.subr.bf16.mxu0 0
  %1311 = vmatpush1.bf16.msra.mxu0 0
  %1312 = vmatprep.subr.bf16.mxu0 0
  %1313 = vmatpush1.bf16.msra.mxu0 0
  %1314 = vmatprep.subr.bf16.mxu0 0
  %1315 = vmatpush1.bf16.msra.mxu0 0
  %1316 = vmatprep.subr.bf16.mxu0 0
  %1317 = vmatpush1.bf16.msra.mxu0 0
  %1318 = vmatprep.subr.bf16.mxu0 0
  %1319 = vmatpush1.bf16.msra.mxu0 0
  %1320 = vmatprep.subr.bf16.mxu0 0
  %1321 = vmatpush1.bf16.msra.mxu0 0
  %1322 = vmatprep.mubr.bf16.mxu0 0
  %1323 = vmatmul.mubr.bf16.gmra.mrb[0].mxu0 %v1288
  %v1324 = vpop.f32.mrb[0].mxu0
  %v1325 = vadd.f32 %v893, %v1324
  %v1326 = vpop.f32.mrb[0].mxu0
  %v1327 = vpop.f32.mrb[0].mxu0
  %v1328 = vpop.f32.mrb[0].mxu0
  %1329 = vdwg.mxu0
  %v1330 = vtanh.pop %v1325
  %v1331 = vpack.c.bf16 %v1330, %v1330
  %v1333 = vsel %vm922, %v1331, 0
  %1335 = vmatprep.subr.bf16.mxu0 0
  %1336 = vmatpush1.bf16.msra.mxu0 %v917
  %1337 = vmatprep.subr.bf16.mxu0 0
  %1338 = vmatpush1.bf16.msra.mxu0 %v918
  %1339 = vmatprep.subr.bf16.mxu0 0
  %1340 = vmatpush1.bf16.msra.mxu0 %v928
  %1341 = vmatprep.subr.bf16.mxu0 0
  %1342 = vmatpush1.bf16.msra.mxu0 0
  %1343 = vmatprep.subr.bf16.mxu0 0
  %1344 = vmatpush1.bf16.msra.mxu0 0
  %1345 = vmatprep.subr.bf16.mxu0 0
  %1346 = vmatpush1.bf16.msra.mxu0 0
  %1347 = vmatprep.subr.bf16.mxu0 0
  %1348 = vmatpush1.bf16.msra.mxu0 0
  %1349 = vmatprep.subr.bf16.mxu0 0
  %1350 = vmatpush1.bf16.msra.mxu0 0
  %1351 = vmatprep.subr.bf16.mxu0 0
  %1352 = vmatpush1.bf16.msra.mxu0 0
  %1353 = vmatprep.subr.bf16.mxu0 0
  %1354 = vmatpush1.bf16.msra.mxu0 0
  %1355 = vmatprep.subr.bf16.mxu0 0
  %1356 = vmatpush1.bf16.msra.mxu0 0
  %1357 = vmatprep.subr.bf16.mxu0 0
  %1358 = vmatpush1.bf16.msra.mxu0 0
  %1359 = vmatprep.subr.bf16.mxu0 0
  %1360 = vmatpush1.bf16.msra.mxu0 0
  %1361 = vmatprep.subr.bf16.mxu0 0
  %1362 = vmatpush1.bf16.msra.mxu0 0
  %1363 = vmatprep.subr.bf16.mxu0 0
  %1364 = vmatpush1.bf16.msra.mxu0 0
  %1365 = vmatprep.subr.bf16.mxu0 0
  %1366 = vmatpush1.bf16.msra.mxu0 0
  %1367 = vmatprep.mubr.bf16.mxu0 0
  %1368 = vmatmul.mubr.bf16.gmra.mrb[0].mxu0 %v1333
  %v1369 = vpop.f32.mrb[0].mxu0
  %v1370 = vadd.f32 %v899, %v1369
  %v1371 = vpop.f32.mrb[0].mxu0
  %v1372 = vpop.f32.mrb[0].mxu0
  %v1373 = vpop.f32.mrb[0].mxu0
  %1374 = vdwg.mxu0
  %v1375 = vtanh.pop %v1370
  %v1376 = vld [vmem:[%s3] sm:$0xff]
  %v1377 = vld [vmem:[%s3 + $0x8] sm:$0xff]
  %v1378 = vld [vmem:[%s3 + $0x10] sm:$0xff]
  %v1379 = vld [vmem:[%s3 + $0x18] sm:$0xff]
  %v1380 = vld [vmem:[%s3 + $0x20] sm:$0xf]
  %v1381 = vld [vmem:[#allocation2] sm:$0x1]
  %v1383 = vlaneseq
  %v1384 = vshrl.u32 %v1383, 7
  %v1385 = vsub.s32 0, %v1384
  %v1386 = vrot.slane %v1381, %v1385
  %v1389 = vsel %vm922, %v1375, 0
  %vm1391 = vcmask 1043456
  %v1393 = vsel %vm1391, %v1380, 0
  %1395 = vmatprep.subr.mxu0 0.0
  %v1396 = vand.u32 %v1376, 4294901760
  %1397 = vmatpush1.msra.mxu0 %v1396
  %1398 = vmatprep.subr.mxu0 0.0
  %v1399 = vand.u32 %v1377, 4294901760
  %1400 = vmatpush1.msra.mxu0 %v1399
  %1401 = vmatprep.subr.mxu0 0.0
  %v1402 = vand.u32 %v1378, 4294901760
  %1403 = vmatpush1.msra.mxu0 %v1402
  %1404 = vmatprep.subr.mxu0 0.0
  %v1405 = vand.u32 %v1379, 4294901760
  %1406 = vmatpush1.msra.mxu0 %v1405
  %1407 = vmatprep.subr.mxu0 0.0
  %v1408 = vand.u32 %v1393, 4294901760
  %1409 = vmatpush1.msra.mxu0 %v1408
  %1410 = vmatprep.subr.mxu0 0.0
  %1411 = vmatpush1.msra.mxu0 0.0
  %1412 = vmatprep.subr.mxu0 0.0
  %1413 = vmatpush1.msra.mxu0 0.0
  %1414 = vmatprep.subr.mxu0 0.0
  %1415 = vmatpush1.msra.mxu0 0.0
  %1416 = vmatprep.subr.mxu0 0.0
  %1417 = vmatpush1.msra.mxu0 0.0
  %1418 = vmatprep.subr.mxu0 0.0
  %1419 = vmatpush1.msra.mxu0 0.0
  %1420 = vmatprep.subr.mxu0 0.0
  %1421 = vmatpush1.msra.mxu0 0.0
  %1422 = vmatprep.subr.mxu0 0.0
  %1423 = vmatpush1.msra.mxu0 0.0
  %1424 = vmatprep.subr.mxu0 0.0
  %1425 = vmatpush1.msra.mxu0 0.0
  %1426 = vmatprep.subr.mxu0 0.0
  %1427 = vmatpush1.msra.mxu0 0.0
  %1428 = vmatprep.subr.mxu0 0.0
  %1429 = vmatpush1.msra.mxu0 0.0
  %1430 = vmatprep.subr.mxu0 0.0
  %1431 = vmatpush1.msra.mxu0 0.0
  %1432 = vmatprep.subr.mxu0 0.0
  %1433 = vmatpush1.msra.mxu0 0.0
  %1434 = vmatprep.subr.mxu0 0.0
  %1435 = vmatpush1.msra.mxu0 0.0
  %1436 = vmatprep.subr.mxu0 0.0
  %1437 = vmatpush1.msra.mxu0 0.0
  %1438 = vmatprep.subr.mxu0 0.0
  %1439 = vmatpush1.msra.mxu0 0.0
  %1440 = vmatprep.subr.mxu0 0.0
  %1441 = vmatpush1.msra.mxu0 0.0
  %1442 = vmatprep.subr.mxu0 0.0
  %1443 = vmatpush1.msra.mxu0 0.0
  %1444 = vmatprep.subr.mxu0 0.0
  %1445 = vmatpush1.msra.mxu0 0.0
  %1446 = vmatprep.subr.mxu0 0.0
  %1447 = vmatpush1.msra.mxu0 0.0
  %1448 = vmatprep.subr.mxu0 0.0
  %1449 = vmatpush1.msra.mxu0 0.0
  %1450 = vmatprep.subr.mxu0 0.0
  %1451 = vmatpush1.msra.mxu0 0.0
  %1452 = vmatprep.subr.mxu0 0.0
  %1453 = vmatpush1.msra.mxu0 0.0
  %1454 = vmatprep.subr.mxu0 0.0
  %1455 = vmatpush1.msra.mxu0 0.0
  %1456 = vmatprep.subr.mxu0 0.0
  %1457 = vmatpush1.msra.mxu0 0.0
  %1458 = vmatprep.subr.mxu0 0.0
  %1459 = vmatpush1.msra.mxu0 0.0
  %1460 = vmatprep.subr.mxu0 0.0
  %1461 = vmatpush1.msra.mxu0 0.0
  %1462 = vmatprep.subr.mxu0 0.0
  %1463 = vmatpush1.msra.mxu0 0.0
  %1464 = vmatprep.mubr.f32.mxu0 0.0
  %v1465 = vand.u32 %v1389, 4294901760
  %v1466 = vsub.f32 %v1389, %v1465
  %v1467 = vand.u32 %v1466, 4294901760
  %v1468 = vsub.f32 %v1466, %v1467
  %v1469 = vand.u32 %v1468, 4294901760
  %1470 = vmatmul.mubr.f32.gmra.mrb[0].mxu0 %v1469
  %v1471 = vpop.f32.mrb[0].mxu0
  %v1472 = vadd.f32 %v1386, %v1471
  %v1473 = vpop.f32.mrb[0].mxu0
  %1474 = vdwg.mxu0
  %1475 = vmatprep.subr.mxu0 0.0
  %v1476 = vand.u32 %v1376, 4294901760
  %v1477 = vsub.f32 %v1376, %v1476
  %v1478 = vand.u32 %v1477, 4294901760
  %v1479 = vsub.f32 %v1477, %v1478
  %v1480 = vand.u32 %v1479, 4294901760
  %1481 = vmatpush1.msra.mxu0 %v1480
  %1482 = vmatprep.subr.mxu0 0.0
  %v1483 = vand.u32 %v1377, 4294901760
  %v1484 = vsub.f32 %v1377, %v1483
  %v1485 = vand.u32 %v1484, 4294901760
  %v1486 = vsub.f32 %v1484, %v1485
  %v1487 = vand.u32 %v1486, 4294901760
  %1488 = vmatpush1.msra.mxu0 %v1487
  %1489 = vmatprep.subr.mxu0 0.0
  %v1490 = vand.u32 %v1378, 4294901760
  %v1491 = vsub.f32 %v1378, %v1490
  %v1492 = vand.u32 %v1491, 4294901760
  %v1493 = vsub.f32 %v1491, %v1492
  %v1494 = vand.u32 %v1493, 4294901760
  %1495 = vmatpush1.msra.mxu0 %v1494
  %1496 = vmatprep.subr.mxu0 0.0
  %v1497 = vand.u32 %v1379, 4294901760
  %v1498 = vsub.f32 %v1379, %v1497
  %v1499 = vand.u32 %v1498, 4294901760
  %v1500 = vsub.f32 %v1498, %v1499
  %v1501 = vand.u32 %v1500, 4294901760
  %1502 = vmatpush1.msra.mxu0 %v1501
  %1503 = vmatprep.subr.mxu0 0.0
  %v1504 = vand.u32 %v1393, 4294901760
  %v1505 = vsub.f32 %v1393, %v1504
  %v1506 = vand.u32 %v1505, 4294901760
  %v1507 = vsub.f32 %v1505, %v1506
  %v1508 = vand.u32 %v1507, 4294901760
  %1509 = vmatpush1.msra.mxu0 %v1508
  %1510 = vmatprep.subr.mxu0 0.0
  %1511 = vmatpush1.msra.mxu0 0.0
  %1512 = vmatprep.subr.mxu0 0.0
  %1513 = vmatpush1.msra.mxu0 0.0
  %1514 = vmatprep.subr.mxu0 0.0
  %1515 = vmatpush1.msra.mxu0 0.0
  %1516 = vmatprep.subr.mxu0 0.0
  %1517 = vmatpush1.msra.mxu0 0.0
  %1518 = vmatprep.subr.mxu0 0.0
  %1519 = vmatpush1.msra.mxu0 0.0
  %1520 = vmatprep.subr.mxu0 0.0
  %1521 = vmatpush1.msra.mxu0 0.0
  %1522 = vmatprep.subr.mxu0 0.0
  %1523 = vmatpush1.msra.mxu0 0.0
  %1524 = vmatprep.subr.mxu0 0.0
  %1525 = vmatpush1.msra.mxu0 0.0
  %1526 = vmatprep.subr.mxu0 0.0
  %1527 = vmatpush1.msra.mxu0 0.0
  %1528 = vmatprep.subr.mxu0 0.0
  %1529 = vmatpush1.msra.mxu0 0.0
  %1530 = vmatprep.subr.mxu0 0.0
  %1531 = vmatpush1.msra.mxu0 0.0
  %1532 = vmatprep.subr.mxu0 0.0
  %1533 = vmatpush1.msra.mxu0 0.0
  %1534 = vmatprep.subr.mxu0 0.0
  %1535 = vmatpush1.msra.mxu0 0.0
  %1536 = vmatprep.subr.mxu0 0.0
  %1537 = vmatpush1.msra.mxu0 0.0
  %1538 = vmatprep.subr.mxu0 0.0
  %1539 = vmatpush1.msra.mxu0 0.0
  %1540 = vmatprep.subr.mxu0 0.0
  %1541 = vmatpush1.msra.mxu0 0.0
  %1542 = vmatprep.subr.mxu0 0.0
  %1543 = vmatpush1.msra.mxu0 0.0
  %1544 = vmatprep.subr.mxu0 0.0
  %1545 = vmatpush1.msra.mxu0 0.0
  %1546 = vmatprep.subr.mxu0 0.0
  %1547 = vmatpush1.msra.mxu0 0.0
  %1548 = vmatprep.subr.mxu0 0.0
  %1549 = vmatpush1.msra.mxu0 0.0
  %1550 = vmatprep.subr.mxu0 0.0
  %1551 = vmatpush1.msra.mxu0 0.0
  %1552 = vmatprep.subr.mxu0 0.0
  %1553 = vmatpush1.msra.mxu0 0.0
  %1554 = vmatprep.subr.mxu0 0.0
  %1555 = vmatpush1.msra.mxu0 0.0
  %1556 = vmatprep.subr.mxu0 0.0
  %1557 = vmatpush1.msra.mxu0 0.0
  %1558 = vmatprep.subr.mxu0 0.0
  %1559 = vmatpush1.msra.mxu0 0.0
  %1560 = vmatprep.subr.mxu0 0.0
  %1561 = vmatpush1.msra.mxu0 0.0
  %1562 = vmatprep.subr.mxu0 0.0
  %1563 = vmatpush1.msra.mxu0 0.0
  %1564 = vmatprep.mubr.f32.mxu0 0.0
  %v1565 = vand.u32 %v1389, 4294901760
  %1566 = vmatmul.mubr.f32.gmra.mrb[0].mxu0 %v1565
  %v1567 = vpop.f32.mrb[0].mxu0
  %v1568 = vadd.f32 %v1472, %v1567
  %v1569 = vpop.f32.mrb[0].mxu0
  %1570 = vdwg.mxu0
  %1571 = vmatprep.subr.mxu0 0.0
  %v1572 = vand.u32 %v1376, 4294901760
  %v1573 = vsub.f32 %v1376, %v1572
  %1574 = vmatpush1.msra.mxu0 %v1573
  %1575 = vmatprep.subr.mxu0 0.0
  %v1576 = vand.u32 %v1377, 4294901760
  %v1577 = vsub.f32 %v1377, %v1576
  %1578 = vmatpush1.msra.mxu0 %v1577
  %1579 = vmatprep.subr.mxu0 0.0
  %v1580 = vand.u32 %v1378, 4294901760
  %v1581 = vsub.f32 %v1378, %v1580
  %1582 = vmatpush1.msra.mxu0 %v1581
  %1583 = vmatprep.subr.mxu0 0.0
  %v1584 = vand.u32 %v1379, 4294901760
  %v1585 = vsub.f32 %v1379, %v1584
  %1586 = vmatpush1.msra.mxu0 %v1585
  %1587 = vmatprep.subr.mxu0 0.0
  %v1588 = vand.u32 %v1393, 4294901760
  %v1589 = vsub.f32 %v1393, %v1588
  %1590 = vmatpush1.msra.mxu0 %v1589
  %1591 = vmatprep.subr.mxu0 0.0
  %1592 = vmatpush1.msra.mxu0 0.0
  %1593 = vmatprep.subr.mxu0 0.0
  %1594 = vmatpush1.msra.mxu0 0.0
  %1595 = vmatprep.subr.mxu0 0.0
  %1596 = vmatpush1.msra.mxu0 0.0
  %1597 = vmatprep.subr.mxu0 0.0
  %1598 = vmatpush1.msra.mxu0 0.0
  %1599 = vmatprep.subr.mxu0 0.0
  %1600 = vmatpush1.msra.mxu0 0.0
  %1601 = vmatprep.subr.mxu0 0.0
  %1602 = vmatpush1.msra.mxu0 0.0
  %1603 = vmatprep.subr.mxu0 0.0
  %1604 = vmatpush1.msra.mxu0 0.0
  %1605 = vmatprep.subr.mxu0 0.0
  %1606 = vmatpush1.msra.mxu0 0.0
  %1607 = vmatprep.subr.mxu0 0.0
  %1608 = vmatpush1.msra.mxu0 0.0
  %1609 = vmatprep.subr.mxu0 0.0
  %1610 = vmatpush1.msra.mxu0 0.0
  %1611 = vmatprep.subr.mxu0 0.0
  %1612 = vmatpush1.msra.mxu0 0.0
  %1613 = vmatprep.subr.mxu0 0.0
  %1614 = vmatpush1.msra.mxu0 0.0
  %1615 = vmatprep.subr.mxu0 0.0
  %1616 = vmatpush1.msra.mxu0 0.0
  %1617 = vmatprep.subr.mxu0 0.0
  %1618 = vmatpush1.msra.mxu0 0.0
  %1619 = vmatprep.subr.mxu0 0.0
  %1620 = vmatpush1.msra.mxu0 0.0
  %1621 = vmatprep.subr.mxu0 0.0
  %1622 = vmatpush1.msra.mxu0 0.0
  %1623 = vmatprep.subr.mxu0 0.0
  %1624 = vmatpush1.msra.mxu0 0.0
  %1625 = vmatprep.subr.mxu0 0.0
  %1626 = vmatpush1.msra.mxu0 0.0
  %1627 = vmatprep.subr.mxu0 0.0
  %1628 = vmatpush1.msra.mxu0 0.0
  %1629 = vmatprep.subr.mxu0 0.0
  %1630 = vmatpush1.msra.mxu0 0.0
  %1631 = vmatprep.subr.mxu0 0.0
  %1632 = vmatpush1.msra.mxu0 0.0
  %1633 = vmatprep.subr.mxu0 0.0
  %1634 = vmatpush1.msra.mxu0 0.0
  %1635 = vmatprep.subr.mxu0 0.0
  %1636 = vmatpush1.msra.mxu0 0.0
  %1637 = vmatprep.subr.mxu0 0.0
  %1638 = vmatpush1.msra.mxu0 0.0
  %1639 = vmatprep.subr.mxu0 0.0
  %1640 = vmatpush1.msra.mxu0 0.0
  %1641 = vmatprep.subr.mxu0 0.0
  %1642 = vmatpush1.msra.mxu0 0.0
  %1643 = vmatprep.subr.mxu0 0.0
  %1644 = vmatpush1.msra.mxu0 0.0
  %1645 = vmatprep.mubr.f32.mxu0 0.0
  %v1646 = vand.u32 %v1389, 4294901760
  %v1647 = vsub.f32 %v1389, %v1646
  %1648 = vmatmul.mubr.f32.gmra.mrb[0].mxu0 %v1647
  %v1649 = vpop.f32.mrb[0].mxu0
  %v1650 = vadd.f32 %v1568, %v1649
  %v1651 = vpop.f32.mrb[0].mxu0
  %1652 = vdwg.mxu0
  %1653 = vmatprep.subr.mxu0 0.0
  %v1654 = vand.u32 %v1376, 4294901760
  %1655 = vmatpush1.msra.mxu0 %v1654
  %1656 = vmatprep.subr.mxu0 0.0
  %v1657 = vand.u32 %v1377, 4294901760
  %1658 = vmatpush1.msra.mxu0 %v1657
  %1659 = vmatprep.subr.mxu0 0.0
  %v1660 = vand.u32 %v1378, 4294901760
  %1661 = vmatpush1.msra.mxu0 %v1660
  %1662 = vmatprep.subr.mxu0 0.0
  %v1663 = vand.u32 %v1379, 4294901760
  %1664 = vmatpush1.msra.mxu0 %v1663
  %1665 = vmatprep.subr.mxu0 0.0
  %v1666 = vand.u32 %v1393, 4294901760
  %1667 = vmatpush1.msra.mxu0 %v1666
  %1668 = vmatprep.subr.mxu0 0.0
  %1669 = vmatpush1.msra.mxu0 0.0
  %1670 = vmatprep.subr.mxu0 0.0
  %1671 = vmatpush1.msra.mxu0 0.0
  %1672 = vmatprep.subr.mxu0 0.0
  %1673 = vmatpush1.msra.mxu0 0.0
  %1674 = vmatprep.subr.mxu0 0.0
  %1675 = vmatpush1.msra.mxu0 0.0
  %1676 = vmatprep.subr.mxu0 0.0
  %1677 = vmatpush1.msra.mxu0 0.0
  %1678 = vmatprep.subr.mxu0 0.0
  %1679 = vmatpush1.msra.mxu0 0.0
  %1680 = vmatprep.subr.mxu0 0.0
  %1681 = vmatpush1.msra.mxu0 0.0
  %1682 = vmatprep.subr.mxu0 0.0
  %1683 = vmatpush1.msra.mxu0 0.0
  %1684 = vmatprep.subr.mxu0 0.0
  %1685 = vmatpush1.msra.mxu0 0.0
  %1686 = vmatprep.subr.mxu0 0.0
  %1687 = vmatpush1.msra.mxu0 0.0
  %1688 = vmatprep.subr.mxu0 0.0
  %1689 = vmatpush1.msra.mxu0 0.0
  %1690 = vmatprep.subr.mxu0 0.0
  %1691 = vmatpush1.msra.mxu0 0.0
  %1692 = vmatprep.subr.mxu0 0.0
  %1693 = vmatpush1.msra.mxu0 0.0
  %1694 = vmatprep.subr.mxu0 0.0
  %1695 = vmatpush1.msra.mxu0 0.0
  %1696 = vmatprep.subr.mxu0 0.0
  %1697 = vmatpush1.msra.mxu0 0.0
  %1698 = vmatprep.subr.mxu0 0.0
  %1699 = vmatpush1.msra.mxu0 0.0
  %1700 = vmatprep.subr.mxu0 0.0
  %1701 = vmatpush1.msra.mxu0 0.0
  %1702 = vmatprep.subr.mxu0 0.0
  %1703 = vmatpush1.msra.mxu0 0.0
  %1704 = vmatprep.subr.mxu0 0.0
  %1705 = vmatpush1.msra.mxu0 0.0
  %1706 = vmatprep.subr.mxu0 0.0
  %1707 = vmatpush1.msra.mxu0 0.0
  %1708 = vmatprep.subr.mxu0 0.0
  %1709 = vmatpush1.msra.mxu0 0.0
  %1710 = vmatprep.subr.mxu0 0.0
  %1711 = vmatpush1.msra.mxu0 0.0
  %1712 = vmatprep.subr.mxu0 0.0
  %1713 = vmatpush1.msra.mxu0 0.0
  %1714 = vmatprep.subr.mxu0 0.0
  %1715 = vmatpush1.msra.mxu0 0.0
  %1716 = vmatprep.subr.mxu0 0.0
  %1717 = vmatpush1.msra.mxu0 0.0
  %1718 = vmatprep.subr.mxu0 0.0
  %1719 = vmatpush1.msra.mxu0 0.0
  %1720 = vmatprep.subr.mxu0 0.0
  %1721 = vmatpush1.msra.mxu0 0.0
  %1722 = vmatprep.mubr.f32.mxu0 0.0
  %v1723 = vand.u32 %v1389, 4294901760
  %v1724 = vsub.f32 %v1389, %v1723
  %v1725 = vand.u32 %v1724, 4294901760
  %1726 = vmatmul.mubr.f32.gmra.mrb[0].mxu0 %v1725
  %v1727 = vpop.f32.mrb[0].mxu0
  %v1728 = vadd.f32 %v1650, %v1727
  %v1729 = vpop.f32.mrb[0].mxu0
  %1730 = vdwg.mxu0
  %1731 = vmatprep.subr.mxu0 0.0
  %v1732 = vand.u32 %v1376, 4294901760
  %v1733 = vsub.f32 %v1376, %v1732
  %v1734 = vand.u32 %v1733, 4294901760
  %1735 = vmatpush1.msra.mxu0 %v1734
  %1736 = vmatprep.subr.mxu0 0.0
  %v1737 = vand.u32 %v1377, 4294901760
  %v1738 = vsub.f32 %v1377, %v1737
  %v1739 = vand.u32 %v1738, 4294901760
  %1740 = vmatpush1.msra.mxu0 %v1739
  %1741 = vmatprep.subr.mxu0 0.0
  %v1742 = vand.u32 %v1378, 4294901760
  %v1743 = vsub.f32 %v1378, %v1742
  %v1744 = vand.u32 %v1743, 4294901760
  %1745 = vmatpush1.msra.mxu0 %v1744
  %1746 = vmatprep.subr.mxu0 0.0
  %v1747 = vand.u32 %v1379, 4294901760
  %v1748 = vsub.f32 %v1379, %v1747
  %v1749 = vand.u32 %v1748, 4294901760
  %1750 = vmatpush1.msra.mxu0 %v1749
  %1751 = vmatprep.subr.mxu0 0.0
  %v1752 = vand.u32 %v1393, 4294901760
  %v1753 = vsub.f32 %v1393, %v1752
  %v1754 = vand.u32 %v1753, 4294901760
  %1755 = vmatpush1.msra.mxu0 %v1754
  %1756 = vmatprep.subr.mxu0 0.0
  %1757 = vmatpush1.msra.mxu0 0.0
  %1758 = vmatprep.subr.mxu0 0.0
  %1759 = vmatpush1.msra.mxu0 0.0
  %1760 = vmatprep.subr.mxu0 0.0
  %1761 = vmatpush1.msra.mxu0 0.0
  %1762 = vmatprep.subr.mxu0 0.0
  %1763 = vmatpush1.msra.mxu0 0.0
  %1764 = vmatprep.subr.mxu0 0.0
  %1765 = vmatpush1.msra.mxu0 0.0
  %1766 = vmatprep.subr.mxu0 0.0
  %1767 = vmatpush1.msra.mxu0 0.0
  %1768 = vmatprep.subr.mxu0 0.0
  %1769 = vmatpush1.msra.mxu0 0.0
  %1770 = vmatprep.subr.mxu0 0.0
  %1771 = vmatpush1.msra.mxu0 0.0
  %1772 = vmatprep.subr.mxu0 0.0
  %1773 = vmatpush1.msra.mxu0 0.0
  %1774 = vmatprep.subr.mxu0 0.0
  %1775 = vmatpush1.msra.mxu0 0.0
  %1776 = vmatprep.subr.mxu0 0.0
  %1777 = vmatpush1.msra.mxu0 0.0
  %1778 = vmatprep.subr.mxu0 0.0
  %1779 = vmatpush1.msra.mxu0 0.0
  %1780 = vmatprep.subr.mxu0 0.0
  %1781 = vmatpush1.msra.mxu0 0.0
  %1782 = vmatprep.subr.mxu0 0.0
  %1783 = vmatpush1.msra.mxu0 0.0
  %1784 = vmatprep.subr.mxu0 0.0
  %1785 = vmatpush1.msra.mxu0 0.0
  %1786 = vmatprep.subr.mxu0 0.0
  %1787 = vmatpush1.msra.mxu0 0.0
  %1788 = vmatprep.subr.mxu0 0.0
  %1789 = vmatpush1.msra.mxu0 0.0
  %1790 = vmatprep.subr.mxu0 0.0
  %1791 = vmatpush1.msra.mxu0 0.0
  %1792 = vmatprep.subr.mxu0 0.0
  %1793 = vmatpush1.msra.mxu0 0.0
  %1794 = vmatprep.subr.mxu0 0.0
  %1795 = vmatpush1.msra.mxu0 0.0
  %1796 = vmatprep.subr.mxu0 0.0
  %1797 = vmatpush1.msra.mxu0 0.0
  %1798 = vmatprep.subr.mxu0 0.0
  %1799 = vmatpush1.msra.mxu0 0.0
  %1800 = vmatprep.subr.mxu0 0.0
  %1801 = vmatpush1.msra.mxu0 0.0
  %1802 = vmatprep.subr.mxu0 0.0
  %1803 = vmatpush1.msra.mxu0 0.0
  %1804 = vmatprep.subr.mxu0 0.0
  %1805 = vmatpush1.msra.mxu0 0.0
  %1806 = vmatprep.subr.mxu0 0.0
  %1807 = vmatpush1.msra.mxu0 0.0
  %1808 = vmatprep.subr.mxu0 0.0
  %1809 = vmatpush1.msra.mxu0 0.0
  %1810 = vmatprep.mubr.f32.mxu0 0.0
  %v1811 = vand.u32 %v1389, 4294901760
  %1812 = vmatmul.mubr.f32.gmra.mrb[0].mxu0 %v1811
  %v1813 = vpop.f32.mrb[0].mxu0
  %v1814 = vadd.f32 %v1728, %v1813
  %v1815 = vpop.f32.mrb[0].mxu0
  %1816 = vdwg.mxu0
  %1817 = vmatprep.subr.mxu0 0.0
  %v1818 = vand.u32 %v1376, 4294901760
  %1819 = vmatpush1.msra.mxu0 %v1818
  %1820 = vmatprep.subr.mxu0 0.0
  %v1821 = vand.u32 %v1377, 4294901760
  %1822 = vmatpush1.msra.mxu0 %v1821
  %1823 = vmatprep.subr.mxu0 0.0
  %v1824 = vand.u32 %v1378, 4294901760
  %1825 = vmatpush1.msra.mxu0 %v1824
  %1826 = vmatprep.subr.mxu0 0.0
  %v1827 = vand.u32 %v1379, 4294901760
  %1828 = vmatpush1.msra.mxu0 %v1827
  %1829 = vmatprep.subr.mxu0 0.0
  %v1830 = vand.u32 %v1393, 4294901760
  %1831 = vmatpush1.msra.mxu0 %v1830
  %1832 = vmatprep.subr.mxu0 0.0
  %1833 = vmatpush1.msra.mxu0 0.0
  %1834 = vmatprep.subr.mxu0 0.0
  %1835 = vmatpush1.msra.mxu0 0.0
  %1836 = vmatprep.subr.mxu0 0.0
  %1837 = vmatpush1.msra.mxu0 0.0
  %1838 = vmatprep.subr.mxu0 0.0
  %1839 = vmatpush1.msra.mxu0 0.0
  %1840 = vmatprep.subr.mxu0 0.0
  %1841 = vmatpush1.msra.mxu0 0.0
  %1842 = vmatprep.subr.mxu0 0.0
  %1843 = vmatpush1.msra.mxu0 0.0
  %1844 = vmatprep.subr.mxu0 0.0
  %1845 = vmatpush1.msra.mxu0 0.0
  %1846 = vmatprep.subr.mxu0 0.0
  %1847 = vmatpush1.msra.mxu0 0.0
  %1848 = vmatprep.subr.mxu0 0.0
  %1849 = vmatpush1.msra.mxu0 0.0
  %1850 = vmatprep.subr.mxu0 0.0
  %1851 = vmatpush1.msra.mxu0 0.0
  %1852 = vmatprep.subr.mxu0 0.0
  %1853 = vmatpush1.msra.mxu0 0.0
  %1854 = vmatprep.subr.mxu0 0.0
  %1855 = vmatpush1.msra.mxu0 0.0
  %1856 = vmatprep.subr.mxu0 0.0
  %1857 = vmatpush1.msra.mxu0 0.0
  %1858 = vmatprep.subr.mxu0 0.0
  %1859 = vmatpush1.msra.mxu0 0.0
  %1860 = vmatprep.subr.mxu0 0.0
  %1861 = vmatpush1.msra.mxu0 0.0
  %1862 = vmatprep.subr.mxu0 0.0
  %1863 = vmatpush1.msra.mxu0 0.0
  %1864 = vmatprep.subr.mxu0 0.0
  %1865 = vmatpush1.msra.mxu0 0.0
  %1866 = vmatprep.subr.mxu0 0.0
  %1867 = vmatpush1.msra.mxu0 0.0
  %1868 = vmatprep.subr.mxu0 0.0
  %1869 = vmatpush1.msra.mxu0 0.0
  %1870 = vmatprep.subr.mxu0 0.0
  %1871 = vmatpush1.msra.mxu0 0.0
  %1872 = vmatprep.subr.mxu0 0.0
  %1873 = vmatpush1.msra.mxu0 0.0
  %1874 = vmatprep.subr.mxu0 0.0
  %1875 = vmatpush1.msra.mxu0 0.0
  %1876 = vmatprep.subr.mxu0 0.0
  %1877 = vmatpush1.msra.mxu0 0.0
  %1878 = vmatprep.subr.mxu0 0.0
  %1879 = vmatpush1.msra.mxu0 0.0
  %1880 = vmatprep.subr.mxu0 0.0
  %1881 = vmatpush1.msra.mxu0 0.0
  %1882 = vmatprep.subr.mxu0 0.0
  %1883 = vmatpush1.msra.mxu0 0.0
  %1884 = vmatprep.subr.mxu0 0.0
  %1885 = vmatpush1.msra.mxu0 0.0
  %1886 = vmatprep.mubr.f32.mxu0 0.0
  %v1887 = vand.u32 %v1389, 4294901760
  %1888 = vmatmul.mubr.f32.gmra.mrb[0].mxu0 %v1887
  %v1889 = vpop.f32.mrb[0].mxu0
  %v1890 = vadd.f32 %v1814, %v1889
  %v1891 = vpop.f32.mrb[0].mxu0
  %1892 = vdwg.mxu0
  %vm1893 = vcmask 7168
  %1894 = vst.msk [vmem:[%s5] sm:$0xff] %vm1893, %v1890
  // Predicated region
  $region22: #{rnn_model_forward.1} parent=0 // pred_check
    _
  $region23: #{rnn_model_forward.1} parent=0 // pred_check_branch
    %1896 = sbr.rel (0) target = $region25
  $region24: #{rnn_model_forward.1} parent=0 // pred_region
    _
  $region25: #{rnn_model_forward.1} parent=0 // pred_fallthru
    _
  // Predicated region
  $region26: #{rnn_model_forward.1} parent=0 // pred_check
    _
  $region27: #{rnn_model_forward.1} parent=0 // pred_check_branch
    %1898 = sbr.rel (0) target = $region29
  $region28: #{rnn_model_forward.1} parent=0 // pred_region
    _
  $region29: #{rnn_model_forward.1} parent=0 // pred_fallthru
    _

</llo_original>
